<compile_context>
chip_gen: v5e
topology: v5e:2x2
jax: 0.10.0
libtpu: 0.0.40
codegen_flags: <defaults>
</compile_context>

<pallas_src>
import numpy as np

import jax
import jax.numpy as jnp
from jax.experimental import pallas as pl
from jax.experimental.pallas import tpu as pltpu

Z_SIZE = 100
BN_EPS = 1e-5


def _round_up(x, m):
    return (x + m - 1) // m * m


# ----------------------------------------------------------------------------
# Fully fused generator kernel (single invocation, everything VMEM resident)
# ----------------------------------------------------------------------------
def _generator_kernel(z_ref, wfc_ref, sfc_ref, rfc_ref,
                      w1_ref, r1_ref, s1_ref,
                      w2_ref, r2_ref, s2_ref,
                      w3_ref, r3_ref, s3_ref,
                      out_ref):
    f32 = jnp.float32
    bf16 = jnp.bfloat16
    batch = out_ref.shape[0]

    # ---- fc  (Dropout(0.3) is identity in eval mode) ------------------------
    # TODO(synk): training-mode stochastic Dropout(0.3) omitted (eval semantics).
    fc = jnp.dot(z_ref[...].astype(bf16), wfc_ref[...],
                 preferred_element_type=f32) + sfc_ref[...]        # (B, 16*c0)

    # ---- (B, 4*4*c0) -> rows=(b,h), cols=(w,c) layout: (B*4, 4*c0) ----------
    fcb = fc.astype(bf16)
    blk = fc.shape[1] // 4
    x = None
    for h in range(4):
        xh = jnp.dot(rfc_ref[h], fcb[:, h * blk:(h + 1) * blk],
                     preferred_element_type=f32)
        x = xh if x is None else x + xh

    # ---- ConvTranspose2d(k=4,s=2,p=1) (+ folded BN/bias) + activation -------
    def deconv(x_in, w_ref, r_ref, s_ref, act):
        xb = x_in.astype(bf16)
        y = None
        for k in range(4):
            u = jnp.dot(xb, w_ref[k], preferred_element_type=f32)      # width
            t = jnp.dot(r_ref[k], u.astype(bf16),
                        preferred_element_type=f32)                    # height
            y = t if y is None else y + t
        y = y + s_ref[...]
        if act == "relu":
            return jnp.maximum(y, 0.0)
        return jnp.tanh(y)

    x = deconv(x, w1_ref, r1_ref, s1_ref, "relu")      # (B*8,  8*2cd)
    x = deconv(x, w2_ref, r2_ref, s2_ref, "relu")      # (B*16, 16*cd)
    y = deconv(x, w3_ref, r3_ref, s3_ref, "tanh")      # (B*32, 3*32), cols (c, w)

    # ---- NCHW (B, 3, 32, 32) output, written once, exact shape --------------
    for co in range(3):
        ch = y[:, co * 32:(co + 1) * 32]               # (B*32, 32)
        for b in range(batch):
            out_ref[b, co, :, :] = ch[b * 32:(b + 1) * 32, :]


# ----------------------------------------------------------------------------
# One-time host-side weight packing
# ----------------------------------------------------------------------------
def _bn_scale_shift(d):
    g = np.asarray(d["gamma"], np.float32)
    v = np.asarray(d["var"], np.float32)
    m = np.asarray(d["mean"], np.float32)
    beta = np.asarray(d["beta"], np.float32)
    b = np.asarray(d["b"], np.float32)
    s = g / np.sqrt(v + BN_EPS)
    return s, s * b + (beta - s * m)


def _deconv_width_matrices(wt, scale, w_in, out_order):
    """Per-kernel-row banded matrices for the width direction of
    ConvTranspose2d(k=4,s=2,p=1):  Wrow_k[(j,ci), col(q,co)] = wt[ci,co,k,q+1-2j]
    (valid kernel cols only).  out_order 'wc' -> col = q*Cout+co,
    'cw' -> col = co*2W+q (channel-blocked, NCHW-friendly)."""
    wt = np.asarray(wt, np.float32) * scale[None, :, None, None]   # fold BN scale
    cin, cout = wt.shape[0], wt.shape[1]
    w_out = 2 * w_in
    mats = np.zeros((4, w_in * cin, w_out * cout), np.float32)
    for k in range(4):
        for j in range(w_in):
            for q in range(w_out):
                kw = q + 1 - 2 * j
                if 0 <= kw < 4:
                    blk = wt[:, :, k, kw]                          # (Cin, Cout)
                    if out_order == "wc":
                        mats[k, j * cin:(j + 1) * cin, q * cout:(q + 1) * cout] = blk
                    else:
                        mats[k, j * cin:(j + 1) * cin, q::w_out] = blk
    return mats


def _row_assembly_matrices(batch, h_in):
    """R_k (B*2H, B*H): even output rows 2a <- U1[a] + U3[a-1];
    odd rows 2a+1 <- U2[a] + U0[a+1].  Batch-block diagonal, boundary exact."""
    h_out = 2 * h_in
    mats = np.zeros((4, batch * h_out, batch * h_in), np.float32)
    for b in range(batch):
        for a in range(h_in):
            mats[1, b * h_out + 2 * a, b * h_in + a] = 1.0
            mats[2, b * h_out + 2 * a + 1, b * h_in + a] = 1.0
            if a - 1 >= 0:
                mats[3, b * h_out + 2 * a, b * h_in + a - 1] = 1.0
            if a + 1 < h_in:
                mats[0, b * h_out + 2 * a + 1, b * h_in + a + 1] = 1.0
    return mats


def prepare_generator(params, conv_dim, batch):
    """One-time packing: BN fold, banded width matrices, row-assembly matrices,
    FC column reorder (c,h,w)->(h,w,c), K padding, bf16 casts."""
    c0 = conv_dim * 4
    fc_out = c0 * 16

    fc_w = np.asarray(params["fc_w"], np.float32).reshape(Z_SIZE, c0, 4, 4)
    fc_w = fc_w.transpose(0, 2, 3, 1).reshape(Z_SIZE, fc_out)
    kp = _round_up(Z_SIZE, 128)
    fc_w_pad = np.zeros((kp, fc_out), np.float32)
    fc_w_pad[:Z_SIZE] = fc_w
    fc_b = (np.asarray(params["fc_b"], np.float32)
            .reshape(c0, 4, 4).transpose(1, 2, 0).reshape(fc_out))

    rfc = np.zeros((4, batch * 4, batch), np.float32)   # (B,16c0) -> (B*4, 4c0)
    for b in range(batch):
        for h in range(4):
            rfc[h, b * 4 + h, b] = 1.0

    def pack_deconv(d, w_in, out_order, batch_norm):
        cout = d["w"].shape[1]
        if batch_norm:
            scale, shift = _bn_scale_shift(d)
        else:
            scale = np.ones((cout,), np.float32)
            shift = np.asarray(d["b"], np.float32)
        mats = _deconv_width_matrices(d["w"], scale, w_in, out_order)
        w_out = 2 * w_in
        shift_row = (np.tile(shift, w_out) if out_order == "wc"
                     else np.repeat(shift, w_out))
        return mats, shift_row.reshape(1, -1)

    w1, s1 = pack_deconv(params["d1"], 4, "wc", True)
    w2, s2 = pack_deconv(params["d2"], 8, "wc", True)
    w3, s3 = pack_deconv(params["d3"], 16, "cw", False)

    bf = jnp.bfloat16
    f32 = jnp.float32
    return {
        "fc_w": jnp.asarray(fc_w_pad, bf),
        "fc_s": jnp.asarray(fc_b.reshape(1, -1), f32),
        "rfc": jnp.asarray(rfc, bf),
        "w1": jnp.asarray(w1, bf),
        "r1": jnp.asarray(_row_assembly_matrices(batch, 4), bf),
        "s1": jnp.asarray(s1, f32),
        "w2": jnp.asarray(w2, bf),
        "r2": jnp.asarray(_row_assembly_matrices(batch, 8), bf),
        "s2": jnp.asarray(s2, f32),
        "w3": jnp.asarray(w3, bf),
        "r3": jnp.asarray(_row_assembly_matrices(batch, 16), bf),
        "s3": jnp.asarray(s3, f32),
    }


# ----------------------------------------------------------------------------
# Forward wrapper (one pallas_call; only glue is a tiny pad of z to 128 lanes)
# ----------------------------------------------------------------------------
def _padded_vmem_bytes(shape, dtype):
    itemsize = np.dtype(dtype).itemsize
    sub = 16 if itemsize == 2 else 8
    s = list(shape)
    if not s:
        return 4 * 128
    s[-1] = _round_up(s[-1], 128)
    if len(s) >= 2:
        s[-2] = _round_up(s[-2], sub)
    n = 1
    for d in s:
        n *= int(d)
    return n * itemsize


def _vmem_limit_bytes(operands):
    total = sum(_padded_vmem_bytes(o.shape, o.dtype) for o in operands)
    # Footprint-derived with generous headroom for in-kernel temporaries;
    # stays tiny vs. any generation's VMEM (64 MiB v7x, 128 MiB v5e/v6e).
    return int(max(8 * 1024 * 1024, 16 * total))


def generator_forward(prep, z):
    b = z.shape[0]
    kp = prep["fc_w"].shape[0]
    z_pad = jnp.pad(z, ((0, 0), (0, kp - z.shape[1])))

    operands = (z_pad, prep["fc_w"], prep["fc_s"], prep["rfc"],
                prep["w1"], prep["r1"], prep["s1"],
                prep["w2"], prep["r2"], prep["s2"],
                prep["w3"], prep["r3"], prep["s3"])
    out_shape = jax.ShapeDtypeStruct((b, 3, 32, 32), jnp.float32)

    return pl.pallas_call(
        _generator_kernel,
        out_shape=out_shape,
        in_specs=[pl.BlockSpec(memory_space=pltpu.MemorySpace.VMEM)
                  for _ in operands],
        out_specs=pl.BlockSpec(memory_space=pltpu.MemorySpace.VMEM),
        compiler_params=pltpu.CompilerParams(
            vmem_limit_bytes=_vmem_limit_bytes(list(operands) + [out_shape])),
    )(*operands)


# ----------------------------------------------------------------------------
# Parameters
# ----------------------------------------------------------------------------
def init_generator_params(key, z_size, conv_dim):
    ks = jax.random.split(key, 8)
    fc_out = conv_dim * 4 * 4 * 4
    params = {
        "fc_w": jax.random.normal(ks[0], (z_size, fc_out), jnp.float32) * 0.02,
        "fc_b": jax.random.normal(ks[1], (fc_out,), jnp.float32) * 0.01,
    }

    def deconv_p(kw_, kb_, cin, cout, batch_norm):
        d = {
            "w": jax.random.normal(kw_, (cin, cout, 4, 4), jnp.float32) * 0.02,
            "b": jax.random.normal(kb_, (cout,), jnp.float32) * 0.01,
        }
        if batch_norm:
            d["gamma"] = jnp.ones((cout,), jnp.float32)
            d["beta"] = jnp.zeros((cout,), jnp.float32)
            d["mean"] = jnp.zeros((cout,), jnp.float32)
            d["var"] = jnp.ones((cout,), jnp.float32)
        return d

    params["d1"] = deconv_p(ks[2], ks[3], conv_dim * 4, conv_dim * 2, True)
    params["d2"] = deconv_p(ks[4], ks[5], conv_dim * 2, conv_dim, True)
    params["d3"] = deconv_p(ks[6], ks[7], conv_dim, 3, False)
    return params


# ----------------------------------------------------------------------------
# Pure-JAX f32 reference (correctness check only)
# ----------------------------------------------------------------------------
def _ref_conv_transpose(x_nhwc, wt, bias):
    w_hwio = jnp.transpose(jnp.flip(wt, (2, 3)), (2, 3, 0, 1))   # (K,K,Cin,Cout)
    y = jax.lax.conv_general_dilated(
        x_nhwc, w_hwio, window_strides=(1, 1), padding=[(2, 2), (2, 2)],
        lhs_dilation=(2, 2), dimension_numbers=("NHWC", "HWIO", "NHWC"))
    return y + bias


def reference_forward(params, z, conv_dim):
    b = z.shape[0]
    x = z @ params["fc_w"] + params["fc_b"]
    x = x.reshape(b, conv_dim * 4, 4, 4).transpose(0, 2, 3, 1)

    def bn(y, d):
        s = d["gamma"] / jnp.sqrt(d["var"] + BN_EPS)
        return (y - d["mean"]) * s + d["beta"]

    y = jax.nn.relu(bn(_ref_conv_transpose(x, params["d1"]["w"],
                                           params["d1"]["b"]), params["d1"]))
    y = jax.nn.relu(bn(_ref_conv_transpose(y, params["d2"]["w"],
                                           params["d2"]["b"]), params["d2"]))
    y = jnp.tanh(_ref_conv_transpose(y, params["d3"]["w"], params["d3"]["b"]))
    return y.transpose(0, 3, 1, 2)


if __name__ == "__main__":
    conv_dim = 4
    batch = 2

    key = jax.random.PRNGKey(0)
    k_params, k_z = jax.random.split(key)
    params = init_generator_params(k_params, Z_SIZE, conv_dim)
    z = jax.random.normal(k_z, (batch, Z_SIZE), jnp.float32)

    prep = prepare_generator(params, conv_dim, batch)   # one-time host packing
    fwd = jax.jit(generator_forward)
    out = jax.block_until_ready(fwd(prep, z))

    assert out.shape == (batch, 3, 32, 32), f"bad shape {out.shape}"
    assert bool(jnp.all(jnp.isfinite(out)))
    assert bool(jnp.all(jnp.abs(out) <= 1.0))           # tanh range

    # correctness vs f32 XLA reference (bf16 MXU inputs -> loose tolerance)
    ref = jax.block_until_ready(reference_forward(params, z, conv_dim))
    max_err = float(jnp.max(jnp.abs(out - ref)))
    assert max_err < 3e-2, f"max |err| vs reference = {max_err}"

    print("KERNEL_OK")
</pallas_src>

<mosaic_0001>
module attributes {stable_mosaic.version = 11 : i64} {
  func.func @_generator_kernel(%arg0: memref<2x128xf32, #tpu.memory_space<vmem>>, %arg1: memref<128x256xbf16, #tpu.memory_space<vmem>>, %arg2: memref<1x256xf32, #tpu.memory_space<vmem>>, %arg3: memref<4x8x2xbf16, #tpu.memory_space<vmem>>, %arg4: memref<4x64x64xbf16, #tpu.memory_space<vmem>>, %arg5: memref<4x16x8xbf16, #tpu.memory_space<vmem>>, %arg6: memref<1x64xf32, #tpu.memory_space<vmem>>, %arg7: memref<4x64x64xbf16, #tpu.memory_space<vmem>>, %arg8: memref<4x32x16xbf16, #tpu.memory_space<vmem>>, %arg9: memref<1x64xf32, #tpu.memory_space<vmem>>, %arg10: memref<4x64x96xbf16, #tpu.memory_space<vmem>>, %arg11: memref<4x64x32xbf16, #tpu.memory_space<vmem>>, %arg12: memref<1x96xf32, #tpu.memory_space<vmem>>, %arg13: memref<2x3x32x32xf32, #tpu.memory_space<vmem>>) attributes {dimension_semantics = [], scalar_prefetch = 0 : i64, scratch_operands = 0 : i64, tpu.core_type = #tpu.core_type<tc>} {
    %c0 = arith.constant 0 : index
    %c0_0 = arith.constant 0 : index
    %0 = vector.load %arg0[%c0, %c0_0] : memref<2x128xf32, #tpu.memory_space<vmem>>, vector<2x128xf32>
    %1 = arith.truncf %0 : vector<2x128xf32> to vector<2x128xbf16>
    %c0_1 = arith.constant 0 : index
    %c0_2 = arith.constant 0 : index
    %2 = vector.load %arg1[%c0_1, %c0_2] : memref<128x256xbf16, #tpu.memory_space<vmem>>, vector<128x256xbf16>
    %cst = arith.constant dense<0.000000e+00> : vector<2x256xf32>
    %3 = tpu.matmul %1, %2, %cst {dimension_numbers = #tpu.dot_dimension_numbers<[1], [0], [0], [1], [0, 0, 1, 1], [], []>} : vector<2x128xbf16>, vector<128x256xbf16>, vector<2x256xf32> -> vector<2x256xf32>
    %c0_3 = arith.constant 0 : index
    %c0_4 = arith.constant 0 : index
    %4 = vector.load %arg2[%c0_3, %c0_4] : memref<1x256xf32, #tpu.memory_space<vmem>>, vector<1x256xf32>
    %5 = vector.broadcast %4 : vector<1x256xf32> to vector<2x256xf32>
    %6 = arith.addf %3, %5 : vector<2x256xf32>
    %7 = arith.truncf %6 : vector<2x256xf32> to vector<2x256xbf16>
    %c0_5 = arith.constant 0 : index
    %c0_6 = arith.constant 0 : index
    %c0_7 = arith.constant 0 : index
    %8 = vector.load %arg3[%c0_5, %c0_6, %c0_7] : memref<4x8x2xbf16, #tpu.memory_space<vmem>>, vector<1x8x2xbf16>
    %9 = vector.shape_cast %8 : vector<1x8x2xbf16> to vector<8x2xbf16>
    %10 = vector.extract_strided_slice %7 {offsets = [0, 0], sizes = [2, 64], strides = [1, 1]} : vector<2x256xbf16> to vector<2x64xbf16>
    %cst_8 = arith.constant dense<0.000000e+00> : vector<8x64xf32>
    %11 = tpu.matmul %9, %10, %cst_8 {dimension_numbers = #tpu.dot_dimension_numbers<[1], [0], [0], [1], [0, 0, 1, 1], [], []>} : vector<8x2xbf16>, vector<2x64xbf16>, vector<8x64xf32> -> vector<8x64xf32>
    %c1 = arith.constant 1 : index
    %c0_9 = arith.constant 0 : index
    %c0_10 = arith.constant 0 : index
    %12 = vector.load %arg3[%c1, %c0_9, %c0_10] : memref<4x8x2xbf16, #tpu.memory_space<vmem>>, vector<1x8x2xbf16>
    %13 = vector.shape_cast %12 : vector<1x8x2xbf16> to vector<8x2xbf16>
    %14 = vector.extract_strided_slice %7 {offsets = [0, 64], sizes = [2, 64], strides = [1, 1]} : vector<2x256xbf16> to vector<2x64xbf16>
    %cst_11 = arith.constant dense<0.000000e+00> : vector<8x64xf32>
    %15 = tpu.matmul %13, %14, %cst_11 {dimension_numbers = #tpu.dot_dimension_numbers<[1], [0], [0], [1], [0, 0, 1, 1], [], []>} : vector<8x2xbf16>, vector<2x64xbf16>, vector<8x64xf32> -> vector<8x64xf32>
    %16 = arith.addf %11, %15 : vector<8x64xf32>
    %c2 = arith.constant 2 : index
    %c0_12 = arith.constant 0 : index
    %c0_13 = arith.constant 0 : index
    %17 = vector.load %arg3[%c2, %c0_12, %c0_13] : memref<4x8x2xbf16, #tpu.memory_space<vmem>>, vector<1x8x2xbf16>
    %18 = vector.shape_cast %17 : vector<1x8x2xbf16> to vector<8x2xbf16>
    %19 = vector.extract_strided_slice %7 {offsets = [0, 128], sizes = [2, 64], strides = [1, 1]} : vector<2x256xbf16> to vector<2x64xbf16>
    %cst_14 = arith.constant dense<0.000000e+00> : vector<8x64xf32>
    %20 = tpu.matmul %18, %19, %cst_14 {dimension_numbers = #tpu.dot_dimension_numbers<[1], [0], [0], [1], [0, 0, 1, 1], [], []>} : vector<8x2xbf16>, vector<2x64xbf16>, vector<8x64xf32> -> vector<8x64xf32>
    %21 = arith.addf %16, %20 : vector<8x64xf32>
    %c3 = arith.constant 3 : index
    %c0_15 = arith.constant 0 : index
    %c0_16 = arith.constant 0 : index
    %22 = vector.load %arg3[%c3, %c0_15, %c0_16] : memref<4x8x2xbf16, #tpu.memory_space<vmem>>, vector<1x8x2xbf16>
    %23 = vector.shape_cast %22 : vector<1x8x2xbf16> to vector<8x2xbf16>
    %24 = vector.extract_strided_slice %7 {offsets = [0, 192], sizes = [2, 64], strides = [1, 1]} : vector<2x256xbf16> to vector<2x64xbf16>
    %cst_17 = arith.constant dense<0.000000e+00> : vector<8x64xf32>
    %25 = tpu.matmul %23, %24, %cst_17 {dimension_numbers = #tpu.dot_dimension_numbers<[1], [0], [0], [1], [0, 0, 1, 1], [], []>} : vector<8x2xbf16>, vector<2x64xbf16>, vector<8x64xf32> -> vector<8x64xf32>
    %26 = arith.addf %21, %25 : vector<8x64xf32>
    %27 = arith.truncf %26 : vector<8x64xf32> to vector<8x64xbf16>
    %c0_18 = arith.constant 0 : index
    %c0_19 = arith.constant 0 : index
    %c0_20 = arith.constant 0 : index
    %28 = vector.load %arg4[%c0_18, %c0_19, %c0_20] : memref<4x64x64xbf16, #tpu.memory_space<vmem>>, vector<1x64x64xbf16>
    %29 = vector.shape_cast %28 : vector<1x64x64xbf16> to vector<64x64xbf16>
    %cst_21 = arith.constant dense<0.000000e+00> : vector<8x64xf32>
    %30 = tpu.matmul %27, %29, %cst_21 {dimension_numbers = #tpu.dot_dimension_numbers<[1], [0], [0], [1], [0, 0, 1, 1], [], []>} : vector<8x64xbf16>, vector<64x64xbf16>, vector<8x64xf32> -> vector<8x64xf32>
    %c0_22 = arith.constant 0 : index
    %c0_23 = arith.constant 0 : index
    %c0_24 = arith.constant 0 : index
    %31 = vector.load %arg5[%c0_22, %c0_23, %c0_24] : memref<4x16x8xbf16, #tpu.memory_space<vmem>>, vector<1x16x8xbf16>
    %32 = vector.shape_cast %31 : vector<1x16x8xbf16> to vector<16x8xbf16>
    %33 = arith.truncf %30 : vector<8x64xf32> to vector<8x64xbf16>
    %cst_25 = arith.constant dense<0.000000e+00> : vector<16x64xf32>
    %34 = tpu.matmul %32, %33, %cst_25 {dimension_numbers = #tpu.dot_dimension_numbers<[1], [0], [0], [1], [0, 0, 1, 1], [], []>} : vector<16x8xbf16>, vector<8x64xbf16>, vector<16x64xf32> -> vector<16x64xf32>
    %c1_26 = arith.constant 1 : index
    %c0_27 = arith.constant 0 : index
    %c0_28 = arith.constant 0 : index
    %35 = vector.load %arg4[%c1_26, %c0_27, %c0_28] : memref<4x64x64xbf16, #tpu.memory_space<vmem>>, vector<1x64x64xbf16>
    %36 = vector.shape_cast %35 : vector<1x64x64xbf16> to vector<64x64xbf16>
    %cst_29 = arith.constant dense<0.000000e+00> : vector<8x64xf32>
    %37 = tpu.matmul %27, %36, %cst_29 {dimension_numbers = #tpu.dot_dimension_numbers<[1], [0], [0], [1], [0, 0, 1, 1], [], []>} : vector<8x64xbf16>, vector<64x64xbf16>, vector<8x64xf32> -> vector<8x64xf32>
    %c1_30 = arith.constant 1 : index
    %c0_31 = arith.constant 0 : index
    %c0_32 = arith.constant 0 : index
    %38 = vector.load %arg5[%c1_30, %c0_31, %c0_32] : memref<4x16x8xbf16, #tpu.memory_space<vmem>>, vector<1x16x8xbf16>
    %39 = vector.shape_cast %38 : vector<1x16x8xbf16> to vector<16x8xbf16>
    %40 = arith.truncf %37 : vector<8x64xf32> to vector<8x64xbf16>
    %cst_33 = arith.constant dense<0.000000e+00> : vector<16x64xf32>
    %41 = tpu.matmul %39, %40, %cst_33 {dimension_numbers = #tpu.dot_dimension_numbers<[1], [0], [0], [1], [0, 0, 1, 1], [], []>} : vector<16x8xbf16>, vector<8x64xbf16>, vector<16x64xf32> -> vector<16x64xf32>
    %42 = arith.addf %34, %41 : vector<16x64xf32>
    %c2_34 = arith.constant 2 : index
    %c0_35 = arith.constant 0 : index
    %c0_36 = arith.constant 0 : index
    %43 = vector.load %arg4[%c2_34, %c0_35, %c0_36] : memref<4x64x64xbf16, #tpu.memory_space<vmem>>, vector<1x64x64xbf16>
    %44 = vector.shape_cast %43 : vector<1x64x64xbf16> to vector<64x64xbf16>
    %cst_37 = arith.constant dense<0.000000e+00> : vector<8x64xf32>
    %45 = tpu.matmul %27, %44, %cst_37 {dimension_numbers = #tpu.dot_dimension_numbers<[1], [0], [0], [1], [0, 0, 1, 1], [], []>} : vector<8x64xbf16>, vector<64x64xbf16>, vector<8x64xf32> -> vector<8x64xf32>
    %c2_38 = arith.constant 2 : index
    %c0_39 = arith.constant 0 : index
    %c0_40 = arith.constant 0 : index
    %46 = vector.load %arg5[%c2_38, %c0_39, %c0_40] : memref<4x16x8xbf16, #tpu.memory_space<vmem>>, vector<1x16x8xbf16>
    %47 = vector.shape_cast %46 : vector<1x16x8xbf16> to vector<16x8xbf16>
    %48 = arith.truncf %45 : vector<8x64xf32> to vector<8x64xbf16>
    %cst_41 = arith.constant dense<0.000000e+00> : vector<16x64xf32>
    %49 = tpu.matmul %47, %48, %cst_41 {dimension_numbers = #tpu.dot_dimension_numbers<[1], [0], [0], [1], [0, 0, 1, 1], [], []>} : vector<16x8xbf16>, vector<8x64xbf16>, vector<16x64xf32> -> vector<16x64xf32>
    %50 = arith.addf %42, %49 : vector<16x64xf32>
    %c3_42 = arith.constant 3 : index
    %c0_43 = arith.constant 0 : index
    %c0_44 = arith.constant 0 : index
    %51 = vector.load %arg4[%c3_42, %c0_43, %c0_44] : memref<4x64x64xbf16, #tpu.memory_space<vmem>>, vector<1x64x64xbf16>
    %52 = vector.shape_cast %51 : vector<1x64x64xbf16> to vector<64x64xbf16>
    %cst_45 = arith.constant dense<0.000000e+00> : vector<8x64xf32>
    %53 = tpu.matmul %27, %52, %cst_45 {dimension_numbers = #tpu.dot_dimension_numbers<[1], [0], [0], [1], [0, 0, 1, 1], [], []>} : vector<8x64xbf16>, vector<64x64xbf16>, vector<8x64xf32> -> vector<8x64xf32>
    %c3_46 = arith.constant 3 : index
    %c0_47 = arith.constant 0 : index
    %c0_48 = arith.constant 0 : index
    %54 = vector.load %arg5[%c3_46, %c0_47, %c0_48] : memref<4x16x8xbf16, #tpu.memory_space<vmem>>, vector<1x16x8xbf16>
    %55 = vector.shape_cast %54 : vector<1x16x8xbf16> to vector<16x8xbf16>
    %56 = arith.truncf %53 : vector<8x64xf32> to vector<8x64xbf16>
    %cst_49 = arith.constant dense<0.000000e+00> : vector<16x64xf32>
    %57 = tpu.matmul %55, %56, %cst_49 {dimension_numbers = #tpu.dot_dimension_numbers<[1], [0], [0], [1], [0, 0, 1, 1], [], []>} : vector<16x8xbf16>, vector<8x64xbf16>, vector<16x64xf32> -> vector<16x64xf32>
    %58 = arith.addf %50, %57 : vector<16x64xf32>
    %c0_50 = arith.constant 0 : index
    %c0_51 = arith.constant 0 : index
    %59 = vector.load %arg6[%c0_50, %c0_51] : memref<1x64xf32, #tpu.memory_space<vmem>>, vector<1x64xf32>
    %60 = vector.broadcast %59 : vector<1x64xf32> to vector<16x64xf32>
    %61 = arith.addf %58, %60 : vector<16x64xf32>
    %cst_52 = arith.constant 0.000000e+00 : f32
    %62 = vector.broadcast %cst_52 : f32 to vector<16x64xf32>
    %63 = arith.maximumf %61, %62 : vector<16x64xf32>
    %64 = arith.truncf %63 : vector<16x64xf32> to vector<16x64xbf16>
    %c0_53 = arith.constant 0 : index
    %c0_54 = arith.constant 0 : index
    %c0_55 = arith.constant 0 : index
    %65 = vector.load %arg7[%c0_53, %c0_54, %c0_55] : memref<4x64x64xbf16, #tpu.memory_space<vmem>>, vector<1x64x64xbf16>
    %66 = vector.shape_cast %65 : vector<1x64x64xbf16> to vector<64x64xbf16>
    %cst_56 = arith.constant dense<0.000000e+00> : vector<16x64xf32>
    %67 = tpu.matmul %64, %66, %cst_56 {dimension_numbers = #tpu.dot_dimension_numbers<[1], [0], [0], [1], [0, 0, 1, 1], [], []>} : vector<16x64xbf16>, vector<64x64xbf16>, vector<16x64xf32> -> vector<16x64xf32>
    %c0_57 = arith.constant 0 : index
    %c0_58 = arith.constant 0 : index
    %c0_59 = arith.constant 0 : index
    %68 = vector.load %arg8[%c0_57, %c0_58, %c0_59] : memref<4x32x16xbf16, #tpu.memory_space<vmem>>, vector<1x32x16xbf16>
    %69 = vector.shape_cast %68 : vector<1x32x16xbf16> to vector<32x16xbf16>
    %70 = arith.truncf %67 : vector<16x64xf32> to vector<16x64xbf16>
    %cst_60 = arith.constant dense<0.000000e+00> : vector<32x64xf32>
    %71 = tpu.matmul %69, %70, %cst_60 {dimension_numbers = #tpu.dot_dimension_numbers<[1], [0], [0], [1], [0, 0, 1, 1], [], []>} : vector<32x16xbf16>, vector<16x64xbf16>, vector<32x64xf32> -> vector<32x64xf32>
    %c1_61 = arith.constant 1 : index
    %c0_62 = arith.constant 0 : index
    %c0_63 = arith.constant 0 : index
    %72 = vector.load %arg7[%c1_61, %c0_62, %c0_63] : memref<4x64x64xbf16, #tpu.memory_space<vmem>>, vector<1x64x64xbf16>
    %73 = vector.shape_cast %72 : vector<1x64x64xbf16> to vector<64x64xbf16>
    %cst_64 = arith.constant dense<0.000000e+00> : vector<16x64xf32>
    %74 = tpu.matmul %64, %73, %cst_64 {dimension_numbers = #tpu.dot_dimension_numbers<[1], [0], [0], [1], [0, 0, 1, 1], [], []>} : vector<16x64xbf16>, vector<64x64xbf16>, vector<16x64xf32> -> vector<16x64xf32>
    %c1_65 = arith.constant 1 : index
    %c0_66 = arith.constant 0 : index
    %c0_67 = arith.constant 0 : index
    %75 = vector.load %arg8[%c1_65, %c0_66, %c0_67] : memref<4x32x16xbf16, #tpu.memory_space<vmem>>, vector<1x32x16xbf16>
    %76 = vector.shape_cast %75 : vector<1x32x16xbf16> to vector<32x16xbf16>
    %77 = arith.truncf %74 : vector<16x64xf32> to vector<16x64xbf16>
    %cst_68 = arith.constant dense<0.000000e+00> : vector<32x64xf32>
    %78 = tpu.matmul %76, %77, %cst_68 {dimension_numbers = #tpu.dot_dimension_numbers<[1], [0], [0], [1], [0, 0, 1, 1], [], []>} : vector<32x16xbf16>, vector<16x64xbf16>, vector<32x64xf32> -> vector<32x64xf32>
    %79 = arith.addf %71, %78 : vector<32x64xf32>
    %c2_69 = arith.constant 2 : index
    %c0_70 = arith.constant 0 : index
    %c0_71 = arith.constant 0 : index
    %80 = vector.load %arg7[%c2_69, %c0_70, %c0_71] : memref<4x64x64xbf16, #tpu.memory_space<vmem>>, vector<1x64x64xbf16>
    %81 = vector.shape_cast %80 : vector<1x64x64xbf16> to vector<64x64xbf16>
    %cst_72 = arith.constant dense<0.000000e+00> : vector<16x64xf32>
    %82 = tpu.matmul %64, %81, %cst_72 {dimension_numbers = #tpu.dot_dimension_numbers<[1], [0], [0], [1], [0, 0, 1, 1], [], []>} : vector<16x64xbf16>, vector<64x64xbf16>, vector<16x64xf32> -> vector<16x64xf32>
    %c2_73 = arith.constant 2 : index
    %c0_74 = arith.constant 0 : index
    %c0_75 = arith.constant 0 : index
    %83 = vector.load %arg8[%c2_73, %c0_74, %c0_75] : memref<4x32x16xbf16, #tpu.memory_space<vmem>>, vector<1x32x16xbf16>
    %84 = vector.shape_cast %83 : vector<1x32x16xbf16> to vector<32x16xbf16>
    %85 = arith.truncf %82 : vector<16x64xf32> to vector<16x64xbf16>
    %cst_76 = arith.constant dense<0.000000e+00> : vector<32x64xf32>
    %86 = tpu.matmul %84, %85, %cst_76 {dimension_numbers = #tpu.dot_dimension_numbers<[1], [0], [0], [1], [0, 0, 1, 1], [], []>} : vector<32x16xbf16>, vector<16x64xbf16>, vector<32x64xf32> -> vector<32x64xf32>
    %87 = arith.addf %79, %86 : vector<32x64xf32>
    %c3_77 = arith.constant 3 : index
    %c0_78 = arith.constant 0 : index
    %c0_79 = arith.constant 0 : index
    %88 = vector.load %arg7[%c3_77, %c0_78, %c0_79] : memref<4x64x64xbf16, #tpu.memory_space<vmem>>, vector<1x64x64xbf16>
    %89 = vector.shape_cast %88 : vector<1x64x64xbf16> to vector<64x64xbf16>
    %cst_80 = arith.constant dense<0.000000e+00> : vector<16x64xf32>
    %90 = tpu.matmul %64, %89, %cst_80 {dimension_numbers = #tpu.dot_dimension_numbers<[1], [0], [0], [1], [0, 0, 1, 1], [], []>} : vector<16x64xbf16>, vector<64x64xbf16>, vector<16x64xf32> -> vector<16x64xf32>
    %c3_81 = arith.constant 3 : index
    %c0_82 = arith.constant 0 : index
    %c0_83 = arith.constant 0 : index
    %91 = vector.load %arg8[%c3_81, %c0_82, %c0_83] : memref<4x32x16xbf16, #tpu.memory_space<vmem>>, vector<1x32x16xbf16>
    %92 = vector.shape_cast %91 : vector<1x32x16xbf16> to vector<32x16xbf16>
    %93 = arith.truncf %90 : vector<16x64xf32> to vector<16x64xbf16>
    %cst_84 = arith.constant dense<0.000000e+00> : vector<32x64xf32>
    %94 = tpu.matmul %92, %93, %cst_84 {dimension_numbers = #tpu.dot_dimension_numbers<[1], [0], [0], [1], [0, 0, 1, 1], [], []>} : vector<32x16xbf16>, vector<16x64xbf16>, vector<32x64xf32> -> vector<32x64xf32>
    %95 = arith.addf %87, %94 : vector<32x64xf32>
    %c0_85 = arith.constant 0 : index
    %c0_86 = arith.constant 0 : index
    %96 = vector.load %arg9[%c0_85, %c0_86] : memref<1x64xf32, #tpu.memory_space<vmem>>, vector<1x64xf32>
    %97 = vector.broadcast %96 : vector<1x64xf32> to vector<32x64xf32>
    %98 = arith.addf %95, %97 : vector<32x64xf32>
    %cst_87 = arith.constant 0.000000e+00 : f32
    %99 = vector.broadcast %cst_87 : f32 to vector<32x64xf32>
    %100 = arith.maximumf %98, %99 : vector<32x64xf32>
    %101 = arith.truncf %100 : vector<32x64xf32> to vector<32x64xbf16>
    %c0_88 = arith.constant 0 : index
    %c0_89 = arith.constant 0 : index
    %c0_90 = arith.constant 0 : index
    %102 = vector.load %arg10[%c0_88, %c0_89, %c0_90] : memref<4x64x96xbf16, #tpu.memory_space<vmem>>, vector<1x64x96xbf16>
    %103 = vector.shape_cast %102 : vector<1x64x96xbf16> to vector<64x96xbf16>
    %cst_91 = arith.constant dense<0.000000e+00> : vector<32x96xf32>
    %104 = tpu.matmul %101, %103, %cst_91 {dimension_numbers = #tpu.dot_dimension_numbers<[1], [0], [0], [1], [0, 0, 1, 1], [], []>} : vector<32x64xbf16>, vector<64x96xbf16>, vector<32x96xf32> -> vector<32x96xf32>
    %c0_92 = arith.constant 0 : index
    %c0_93 = arith.constant 0 : index
    %c0_94 = arith.constant 0 : index
    %105 = vector.load %arg11[%c0_92, %c0_93, %c0_94] : memref<4x64x32xbf16, #tpu.memory_space<vmem>>, vector<1x64x32xbf16>
    %106 = vector.shape_cast %105 : vector<1x64x32xbf16> to vector<64x32xbf16>
    %107 = arith.truncf %104 : vector<32x96xf32> to vector<32x96xbf16>
    %cst_95 = arith.constant dense<0.000000e+00> : vector<64x96xf32>
    %108 = tpu.matmul %106, %107, %cst_95 {dimension_numbers = #tpu.dot_dimension_numbers<[1], [0], [0], [1], [0, 0, 1, 1], [], []>} : vector<64x32xbf16>, vector<32x96xbf16>, vector<64x96xf32> -> vector<64x96xf32>
    %c1_96 = arith.constant 1 : index
    %c0_97 = arith.constant 0 : index
    %c0_98 = arith.constant 0 : index
    %109 = vector.load %arg10[%c1_96, %c0_97, %c0_98] : memref<4x64x96xbf16, #tpu.memory_space<vmem>>, vector<1x64x96xbf16>
    %110 = vector.shape_cast %109 : vector<1x64x96xbf16> to vector<64x96xbf16>
    %cst_99 = arith.constant dense<0.000000e+00> : vector<32x96xf32>
    %111 = tpu.matmul %101, %110, %cst_99 {dimension_numbers = #tpu.dot_dimension_numbers<[1], [0], [0], [1], [0, 0, 1, 1], [], []>} : vector<32x64xbf16>, vector<64x96xbf16>, vector<32x96xf32> -> vector<32x96xf32>
    %c1_100 = arith.constant 1 : index
    %c0_101 = arith.constant 0 : index
    %c0_102 = arith.constant 0 : index
    %112 = vector.load %arg11[%c1_100, %c0_101, %c0_102] : memref<4x64x32xbf16, #tpu.memory_space<vmem>>, vector<1x64x32xbf16>
    %113 = vector.shape_cast %112 : vector<1x64x32xbf16> to vector<64x32xbf16>
    %114 = arith.truncf %111 : vector<32x96xf32> to vector<32x96xbf16>
    %cst_103 = arith.constant dense<0.000000e+00> : vector<64x96xf32>
    %115 = tpu.matmul %113, %114, %cst_103 {dimension_numbers = #tpu.dot_dimension_numbers<[1], [0], [0], [1], [0, 0, 1, 1], [], []>} : vector<64x32xbf16>, vector<32x96xbf16>, vector<64x96xf32> -> vector<64x96xf32>
    %116 = arith.addf %108, %115 : vector<64x96xf32>
    %c2_104 = arith.constant 2 : index
    %c0_105 = arith.constant 0 : index
    %c0_106 = arith.constant 0 : index
    %117 = vector.load %arg10[%c2_104, %c0_105, %c0_106] : memref<4x64x96xbf16, #tpu.memory_space<vmem>>, vector<1x64x96xbf16>
    %118 = vector.shape_cast %117 : vector<1x64x96xbf16> to vector<64x96xbf16>
    %cst_107 = arith.constant dense<0.000000e+00> : vector<32x96xf32>
    %119 = tpu.matmul %101, %118, %cst_107 {dimension_numbers = #tpu.dot_dimension_numbers<[1], [0], [0], [1], [0, 0, 1, 1], [], []>} : vector<32x64xbf16>, vector<64x96xbf16>, vector<32x96xf32> -> vector<32x96xf32>
    %c2_108 = arith.constant 2 : index
    %c0_109 = arith.constant 0 : index
    %c0_110 = arith.constant 0 : index
    %120 = vector.load %arg11[%c2_108, %c0_109, %c0_110] : memref<4x64x32xbf16, #tpu.memory_space<vmem>>, vector<1x64x32xbf16>
    %121 = vector.shape_cast %120 : vector<1x64x32xbf16> to vector<64x32xbf16>
    %122 = arith.truncf %119 : vector<32x96xf32> to vector<32x96xbf16>
    %cst_111 = arith.constant dense<0.000000e+00> : vector<64x96xf32>
    %123 = tpu.matmul %121, %122, %cst_111 {dimension_numbers = #tpu.dot_dimension_numbers<[1], [0], [0], [1], [0, 0, 1, 1], [], []>} : vector<64x32xbf16>, vector<32x96xbf16>, vector<64x96xf32> -> vector<64x96xf32>
    %124 = arith.addf %116, %123 : vector<64x96xf32>
    %c3_112 = arith.constant 3 : index
    %c0_113 = arith.constant 0 : index
    %c0_114 = arith.constant 0 : index
    %125 = vector.load %arg10[%c3_112, %c0_113, %c0_114] : memref<4x64x96xbf16, #tpu.memory_space<vmem>>, vector<1x64x96xbf16>
    %126 = vector.shape_cast %125 : vector<1x64x96xbf16> to vector<64x96xbf16>
    %cst_115 = arith.constant dense<0.000000e+00> : vector<32x96xf32>
    %127 = tpu.matmul %101, %126, %cst_115 {dimension_numbers = #tpu.dot_dimension_numbers<[1], [0], [0], [1], [0, 0, 1, 1], [], []>} : vector<32x64xbf16>, vector<64x96xbf16>, vector<32x96xf32> -> vector<32x96xf32>
    %c3_116 = arith.constant 3 : index
    %c0_117 = arith.constant 0 : index
    %c0_118 = arith.constant 0 : index
    %128 = vector.load %arg11[%c3_116, %c0_117, %c0_118] : memref<4x64x32xbf16, #tpu.memory_space<vmem>>, vector<1x64x32xbf16>
    %129 = vector.shape_cast %128 : vector<1x64x32xbf16> to vector<64x32xbf16>
    %130 = arith.truncf %127 : vector<32x96xf32> to vector<32x96xbf16>
    %cst_119 = arith.constant dense<0.000000e+00> : vector<64x96xf32>
    %131 = tpu.matmul %129, %130, %cst_119 {dimension_numbers = #tpu.dot_dimension_numbers<[1], [0], [0], [1], [0, 0, 1, 1], [], []>} : vector<64x32xbf16>, vector<32x96xbf16>, vector<64x96xf32> -> vector<64x96xf32>
    %132 = arith.addf %124, %131 : vector<64x96xf32>
    %c0_120 = arith.constant 0 : index
    %c0_121 = arith.constant 0 : index
    %133 = vector.load %arg12[%c0_120, %c0_121] : memref<1x96xf32, #tpu.memory_space<vmem>>, vector<1x96xf32>
    %134 = vector.broadcast %133 : vector<1x96xf32> to vector<64x96xf32>
    %135 = arith.addf %132, %134 : vector<64x96xf32>
    %136 = math.tanh %135 : vector<64x96xf32>
    %137 = vector.extract_strided_slice %136 {offsets = [0, 0], sizes = [64, 32], strides = [1, 1]} : vector<64x96xf32> to vector<64x32xf32>
    %138 = vector.extract_strided_slice %137 {offsets = [0, 0], sizes = [32, 32], strides = [1, 1]} : vector<64x32xf32> to vector<32x32xf32>
    %c0_122 = arith.constant 0 : index
    %c0_123 = arith.constant 0 : index
    %c0_124 = arith.constant 0 : index
    %c0_125 = arith.constant 0 : index
    %139 = vector.load %arg13[%c0_122, %c0_123, %c0_124, %c0_125] : memref<2x3x32x32xf32, #tpu.memory_space<vmem>>, vector<1x1x32x32xf32>
    %140 = vector.shape_cast %139 : vector<1x1x32x32xf32> to vector<32x32xf32>
    %141 = vector.shape_cast %138 : vector<32x32xf32> to vector<1x1x32x32xf32>
    tpu.vector_store %arg13[%c0_122, %c0_123, %c0_124, %c0_125], %141 {strides = array<i32>} : memref<2x3x32x32xf32, #tpu.memory_space<vmem>>, vector<1x1x32x32xf32>,
    %142 = vector.extract_strided_slice %137 {offsets = [32, 0], sizes = [32, 32], strides = [1, 1]} : vector<64x32xf32> to vector<32x32xf32>
    %c1_126 = arith.constant 1 : index
    %c0_127 = arith.constant 0 : index
    %c0_128 = arith.constant 0 : index
    %c0_129 = arith.constant 0 : index
    %143 = vector.load %arg13[%c1_126, %c0_127, %c0_128, %c0_129] : memref<2x3x32x32xf32, #tpu.memory_space<vmem>>, vector<1x1x32x32xf32>
    %144 = vector.shape_cast %143 : vector<1x1x32x32xf32> to vector<32x32xf32>
    %145 = vector.shape_cast %142 : vector<32x32xf32> to vector<1x1x32x32xf32>
    tpu.vector_store %arg13[%c1_126, %c0_127, %c0_128, %c0_129], %145 {strides = array<i32>} : memref<2x3x32x32xf32, #tpu.memory_space<vmem>>, vector<1x1x32x32xf32>,
    %146 = vector.extract_strided_slice %136 {offsets = [0, 32], sizes = [64, 32], strides = [1, 1]} : vector<64x96xf32> to vector<64x32xf32>
    %147 = vector.extract_strided_slice %146 {offsets = [0, 0], sizes = [32, 32], strides = [1, 1]} : vector<64x32xf32> to vector<32x32xf32>
    %c0_130 = arith.constant 0 : index
    %c1_131 = arith.constant 1 : index
    %c0_132 = arith.constant 0 : index
    %c0_133 = arith.constant 0 : index
    %148 = vector.load %arg13[%c0_130, %c1_131, %c0_132, %c0_133] : memref<2x3x32x32xf32, #tpu.memory_space<vmem>>, vector<1x1x32x32xf32>
    %149 = vector.shape_cast %148 : vector<1x1x32x32xf32> to vector<32x32xf32>
    %150 = vector.shape_cast %147 : vector<32x32xf32> to vector<1x1x32x32xf32>
    tpu.vector_store %arg13[%c0_130, %c1_131, %c0_132, %c0_133], %150 {strides = array<i32>} : memref<2x3x32x32xf32, #tpu.memory_space<vmem>>, vector<1x1x32x32xf32>,
    %151 = vector.extract_strided_slice %146 {offsets = [32, 0], sizes = [32, 32], strides = [1, 1]} : vector<64x32xf32> to vector<32x32xf32>
    %c1_134 = arith.constant 1 : index
    %c1_135 = arith.constant 1 : index
    %c0_136 = arith.constant 0 : index
    %c0_137 = arith.constant 0 : index
    %152 = vector.load %arg13[%c1_134, %c1_135, %c0_136, %c0_137] : memref<2x3x32x32xf32, #tpu.memory_space<vmem>>, vector<1x1x32x32xf32>
    %153 = vector.shape_cast %152 : vector<1x1x32x32xf32> to vector<32x32xf32>
    %154 = vector.shape_cast %151 : vector<32x32xf32> to vector<1x1x32x32xf32>
    tpu.vector_store %arg13[%c1_134, %c1_135, %c0_136, %c0_137], %154 {strides = array<i32>} : memref<2x3x32x32xf32, #tpu.memory_space<vmem>>, vector<1x1x32x32xf32>,
    %155 = vector.extract_strided_slice %136 {offsets = [0, 64], sizes = [64, 32], strides = [1, 1]} : vector<64x96xf32> to vector<64x32xf32>
    %156 = vector.extract_strided_slice %155 {offsets = [0, 0], sizes = [32, 32], strides = [1, 1]} : vector<64x32xf32> to vector<32x32xf32>
    %c0_138 = arith.constant 0 : index
    %c2_139 = arith.constant 2 : index
    %c0_140 = arith.constant 0 : index
    %c0_141 = arith.constant 0 : index
    %157 = vector.load %arg13[%c0_138, %c2_139, %c0_140, %c0_141] : memref<2x3x32x32xf32, #tpu.memory_space<vmem>>, vector<1x1x32x32xf32>
    %158 = vector.shape_cast %157 : vector<1x1x32x32xf32> to vector<32x32xf32>
    %159 = vector.shape_cast %156 : vector<32x32xf32> to vector<1x1x32x32xf32>
    tpu.vector_store %arg13[%c0_138, %c2_139, %c0_140, %c0_141], %159 {strides = array<i32>} : memref<2x3x32x32xf32, #tpu.memory_space<vmem>>, vector<1x1x32x32xf32>,
    %160 = vector.extract_strided_slice %155 {offsets = [32, 0], sizes = [32, 32], strides = [1, 1]} : vector<64x32xf32> to vector<32x32xf32>
    %c1_142 = arith.constant 1 : index
    %c2_143 = arith.constant 2 : index
    %c0_144 = arith.constant 0 : index
    %c0_145 = arith.constant 0 : index
    %161 = vector.load %arg13[%c1_142, %c2_143, %c0_144, %c0_145] : memref<2x3x32x32xf32, #tpu.memory_space<vmem>>, vector<1x1x32x32xf32>
    %162 = vector.shape_cast %161 : vector<1x1x32x32xf32> to vector<32x32xf32>
    %163 = vector.shape_cast %160 : vector<32x32xf32> to vector<1x1x32x32xf32>
    tpu.vector_store %arg13[%c1_142, %c2_143, %c0_144, %c0_145], %163 {strides = array<i32>} : memref<2x3x32x32xf32, #tpu.memory_space<vmem>>, vector<1x1x32x32xf32>,
    return
  }
}

</mosaic_0001>

<llo_original>
// kernel: generator_forward.1
$region0: #{generator_forward.1}
  #allocation0 [shape = 'u32[]', space=smem, size = 0x4, offset = 0x4, fixed_abs, tag = 'smem constant byte address 0x4 - core index']
  #allocation1 [shape = 'u32[72,128]{1,0:T(1,128)}', space=vmem, size = 0x9000, scoped, tag = 'internal scratch']
  %s0 = inlined_call_operand.vmem [shape: f32[2,128], index: 0, kind: input, shape index: {}]
  %s1 = inlined_call_operand.vmem [shape: bf16[128,256], index: 1, kind: input, shape index: {}]
  %s2 = inlined_call_operand.vmem [shape: f32[1,256], index: 2, kind: input, shape index: {}]
  %s3 = inlined_call_operand.vmem [shape: bf16[4,8,2], index: 3, kind: input, shape index: {}]
  %s4 = inlined_call_operand.hbm [shape: bf16[4,64,64], index: 4, kind: input, shape index: {}]
  %s5 = inlined_call_operand.vmem [shape: bf16[4,16,8], index: 5, kind: input, shape index: {}]
  %s6 = inlined_call_operand.vmem [shape: f32[1,64], index: 6, kind: input, shape index: {}]
  %s7 = inlined_call_operand.hbm [shape: bf16[4,64,64], index: 7, kind: input, shape index: {}]
  %s8 = inlined_call_operand.vmem [shape: bf16[4,32,16], index: 8, kind: input, shape index: {}]
  %s9 = inlined_call_operand.vmem [shape: f32[1,64], index: 9, kind: input, shape index: {}]
  %s10 = inlined_call_operand.hbm [shape: bf16[4,64,96], index: 10, kind: input, shape index: {}]
  %s11 = inlined_call_operand.vmem [shape: bf16[4,64,32], index: 11, kind: input, shape index: {}]
  %s12 = inlined_call_operand.vmem [shape: f32[1,96], index: 12, kind: input, shape index: {}]
  %s13 = inlined_call_operand.hbm [shape: f32[2,3,32,32], index: 13, kind: output, shape index: {}]
  %s14 = sld [smem:[#allocation0]]
  $region74: #{generator_forward.1} parent=0
    _
  %s16 = ssub.s32 1, %s14
  %s17 = scalar_select 0, %s16, %s14
  $region1: #{generator_forward.1} parent=0
    #allocation2 [shape = 'u8[65536]{0}', space=vmem, size = 0x10000, scoped, tag = 'input window, operand 4, single buffered']
    #allocation3 [shape = 's32[1]{0}', space=sflag, size = 0x4, scoped, tag = 'scoped memory for generator_forward.1']
    #allocation4 [shape = 's32[1]{0}', space=sflag, size = 0x4, scoped, tag = 'scoped memory for generator_forward.1']
    #allocation5 [shape = 'u8[65536]{0}', space=vmem, size = 0x10000, scoped, tag = 'input window, operand 7, single buffered']
    #allocation6 [shape = 's32[1]{0}', space=sflag, size = 0x4, scoped, tag = 'scoped memory for generator_forward.1']
    #allocation7 [shape = 'u8[65536]{0}', space=vmem, size = 0x10000, scoped, tag = 'input window, operand 10, single buffered']
    #allocation8 [shape = 'u8[98304]{0}', space=vmem, size = 0x18000, scoped, tag = 'output window, operand 0, single buffered']
    %18 = vsyncpa [#allocation3], 0
    %19 = vsyncpa [#allocation6], 0
    %20 = vsyncpa [#allocation4], 0
    // Predicated region
    $region2: #{generator_forward.1} parent=1 // pred_check
      _
    $region3: #{generator_forward.1} parent=1 // pred_check_branch
      %22 = sbr.rel (0) target = $region5
    $region4: #{generator_forward.1} parent=1 // pred_region
      _
    $region5: #{generator_forward.1} parent=1 // pred_fallthru
      _
    // Predicated region
    $region6: #{generator_forward.1} parent=1 // pred_check
      _
    $region7: #{generator_forward.1} parent=1 // pred_check_branch
      %24 = sbr.rel (0) target = $region9
    $region8: #{generator_forward.1} parent=1 // pred_region
      _
    $region9: #{generator_forward.1} parent=1 // pred_fallthru
      _
    // Predicated region
    $region10: #{generator_forward.1} parent=1 // pred_check
      _
    $region11: #{generator_forward.1} parent=1 // pred_check_branch
      %26 = sbr.rel (0) target = $region13
    $region12: #{generator_forward.1} parent=1 // pred_region
      _
    $region13: #{generator_forward.1} parent=1 // pred_fallthru
      _
    // Predicated region
    $region14: #{generator_forward.1} parent=1 // pred_check
      _
    $region15: #{generator_forward.1} parent=1 // pred_check_branch
      %28 = sbr.rel (0) target = $region17
    $region16: #{generator_forward.1} parent=1 // pred_region
      _
    $region17: #{generator_forward.1} parent=1 // pred_fallthru
      _
    // Predicated region
    $region18: #{generator_forward.1} parent=1 // pred_check
      _
    $region19: #{generator_forward.1} parent=1 // pred_check_branch
      %30 = sbr.rel (0) target = $region21
    $region20: #{generator_forward.1} parent=1 // pred_region
      %32 = vsyncadd [#allocation3], 0
      %s33 = sshll.u32 %s4, 4
      %s34 = int_to_ptr.hbm [resolvable:$true] %s33
      %s35 = sshll.u32 [#allocation2], 4
      %s36 = int_to_ptr.vmem [resolvable:$true] %s35
      %41 = dma.hbm_to_vmem [thread:$0]  %s34, 2048, %s36, [#allocation3], 64, 64, 4
    $region21: #{generator_forward.1} parent=1 // pred_fallthru
      _
    // Predicated region
    $region22: #{generator_forward.1} parent=1 // pred_check
      _
    $region23: #{generator_forward.1} parent=1 // pred_check_branch
      %43 = sbr.rel (0) target = $region25
    $region24: #{generator_forward.1} parent=1 // pred_region
      _
    $region25: #{generator_forward.1} parent=1 // pred_fallthru
      _
    // Predicated region
    $region26: #{generator_forward.1} parent=1 // pred_check
      _
    $region27: #{generator_forward.1} parent=1 // pred_check_branch
      %45 = sbr.rel (0) target = $region29
    $region28: #{generator_forward.1} parent=1 // pred_region
      _
    $region29: #{generator_forward.1} parent=1 // pred_fallthru
      _
    // Predicated region
    $region30: #{generator_forward.1} parent=1 // pred_check
      _
    $region31: #{generator_forward.1} parent=1 // pred_check_branch
      %47 = sbr.rel (0) target = $region33
    $region32: #{generator_forward.1} parent=1 // pred_region
      %49 = vsyncadd [#allocation6], 0
      %s50 = sshll.u32 %s7, 4
      %s51 = int_to_ptr.hbm [resolvable:$true] %s50
      %s52 = sshll.u32 [#allocation5], 4
      %s53 = int_to_ptr.vmem [resolvable:$true] %s52
      %58 = dma.hbm_to_vmem [thread:$0]  %s51, 2048, %s53, [#allocation6], 64, 64, 4
    $region33: #{generator_forward.1} parent=1 // pred_fallthru
      _
    // Predicated region
    $region34: #{generator_forward.1} parent=1 // pred_check
      _
    $region35: #{generator_forward.1} parent=1 // pred_check_branch
      %60 = sbr.rel (0) target = $region37
    $region36: #{generator_forward.1} parent=1 // pred_region
      _
    $region37: #{generator_forward.1} parent=1 // pred_fallthru
      _
    // Predicated region
    $region38: #{generator_forward.1} parent=1 // pred_check
      _
    $region39: #{generator_forward.1} parent=1 // pred_check_branch
      %62 = sbr.rel (0) target = $region41
    $region40: #{generator_forward.1} parent=1 // pred_region
      _
    $region41: #{generator_forward.1} parent=1 // pred_fallthru
      _
    // Predicated region
    $region42: #{generator_forward.1} parent=1 // pred_check
      _
    $region43: #{generator_forward.1} parent=1 // pred_check_branch
      %64 = sbr.rel (0) target = $region45
    $region44: #{generator_forward.1} parent=1 // pred_region
      %66 = vsyncadd [#allocation6], 0
      %s67 = sshll.u32 %s10, 4
      %s68 = int_to_ptr.hbm [resolvable:$true] %s67
      %s69 = sshll.u32 [#allocation7], 4
      %s70 = int_to_ptr.vmem [resolvable:$true] %s69
      %75 = dma.hbm_to_vmem [thread:$0]  %s68, 2048, %s70, [#allocation6], 64, 64, 4
    $region45: #{generator_forward.1} parent=1 // pred_fallthru
      _
    // Predicated region
    $region46: #{generator_forward.1} parent=1 // pred_check
      _
    $region47: #{generator_forward.1} parent=1 // pred_check_branch
      %77 = sbr.rel (0) target = $region49
    $region48: #{generator_forward.1} parent=1 // pred_region
      _
    $region49: #{generator_forward.1} parent=1 // pred_fallthru
      _
    // Predicated region
    $region50: #{generator_forward.1} parent=1 // pred_check
      _
    $region51: #{generator_forward.1} parent=1 // pred_check_branch
      %79 = sbr.rel (0) target = $region53
    $region52: #{generator_forward.1} parent=1 // pred_region
      _
    $region53: #{generator_forward.1} parent=1 // pred_fallthru
      _
    // Predicated region
    $region54: #{generator_forward.1} parent=1 // pred_check
      _
    $region55: #{generator_forward.1} parent=1 // pred_check_branch
      %81 = sbr.rel (0) target = $region57
    $region56: #{generator_forward.1} parent=1 // pred_region
      %83 = dma.done [#allocation3], 2048
    $region57: #{generator_forward.1} parent=1 // pred_fallthru
      _
    // Predicated region
    $region58: #{generator_forward.1} parent=1 // pred_check
      _
    $region59: #{generator_forward.1} parent=1 // pred_check_branch
      %85 = sbr.rel (0) target = $region61
    $region60: #{generator_forward.1} parent=1 // pred_region
      %87 = dma.done [#allocation6], 2048
    $region61: #{generator_forward.1} parent=1 // pred_fallthru
      _
    // Predicated region
    $region62: #{generator_forward.1} parent=1 // pred_check
      _
    $region63: #{generator_forward.1} parent=1 // pred_check_branch
      %89 = sbr.rel (0) target = $region65
    $region64: #{generator_forward.1} parent=1 // pred_region
      %91 = dma.done [#allocation6], 2048
    $region65: #{generator_forward.1} parent=1 // pred_fallthru
      _
    %v93 = vld [vmem:[%s0] sm:$0x3]
    %v94 = vpack.c.bf16 %v93, %v93
    %v95 = vld [vmem:[%s1] sm:$0xff]
    %v96 = vld [vmem:[%s1 + $0x8] sm:$0xff]
    %v97 = vld [vmem:[%s1 + $0x10] sm:$0xff]
    %v98 = vld [vmem:[%s1 + $0x18] sm:$0xff]
    %v99 = vld [vmem:[%s1 + $0x20] sm:$0xff]
    %v100 = vld [vmem:[%s1 + $0x28] sm:$0xff]
    %v101 = vld [vmem:[%s1 + $0x30] sm:$0xff]
    %v102 = vld [vmem:[%s1 + $0x38] sm:$0xff]
    %v103 = vld [vmem:[%s1 + $0x40] sm:$0xff]
    %v104 = vld [vmem:[%s1 + $0x48] sm:$0xff]
    %v105 = vld [vmem:[%s1 + $0x50] sm:$0xff]
    %v106 = vld [vmem:[%s1 + $0x58] sm:$0xff]
    %v107 = vld [vmem:[%s1 + $0x60] sm:$0xff]
    %v108 = vld [vmem:[%s1 + $0x68] sm:$0xff]
    %v109 = vld [vmem:[%s1 + $0x70] sm:$0xff]
    %v110 = vld [vmem:[%s1 + $0x78] sm:$0xff]
    %v111 = vld [vmem:[%s2] sm:$0x3]
    %v113 = vperm.slane %v111, 0
    %v114 = vperm.slane %v111, 1
    %v133 = vunpack.c.l.b16 %v95
    %v134 = vunpack.c.h.b16 %v95
    %v135 = vunpack.c.l.b16 %v96
    %v136 = vunpack.c.h.b16 %v96
    %v137 = vunpack.c.l.b16 %v97
    %v138 = vunpack.c.h.b16 %v97
    %v139 = vunpack.c.l.b16 %v98
    %v140 = vunpack.c.h.b16 %v98
    %v141 = vunpack.c.l.b16 %v99
    %v142 = vunpack.c.h.b16 %v99
    %v143 = vunpack.c.l.b16 %v100
    %v144 = vunpack.c.h.b16 %v100
    %v145 = vunpack.c.l.b16 %v101
    %v146 = vunpack.c.h.b16 %v101
    %v147 = vunpack.c.l.b16 %v102
    %v148 = vunpack.c.h.b16 %v102
    %v149 = vunpack.c.l.b16 %v103
    %v150 = vunpack.c.h.b16 %v103
    %v151 = vunpack.c.l.b16 %v104
    %v152 = vunpack.c.h.b16 %v104
    %v153 = vunpack.c.l.b16 %v105
    %v154 = vunpack.c.h.b16 %v105
    %v155 = vunpack.c.l.b16 %v106
    %v156 = vunpack.c.h.b16 %v106
    %v157 = vunpack.c.l.b16 %v107
    %v158 = vunpack.c.h.b16 %v107
    %v159 = vunpack.c.l.b16 %v108
    %v160 = vunpack.c.h.b16 %v108
    %v161 = vunpack.c.l.b16 %v109
    %v162 = vunpack.c.h.b16 %v109
    %v163 = vunpack.c.l.b16 %v110
    %v164 = vunpack.c.h.b16 %v110
    %v165 = vpack.c.b16 %v135, %v133
    %v166 = vpack.c.b16 %v136, %v134
    %v167 = vpack.c.b16 %v139, %v137
    %v168 = vpack.c.b16 %v140, %v138
    %v169 = vpack.c.b16 %v143, %v141
    %v170 = vpack.c.b16 %v144, %v142
    %v171 = vpack.c.b16 %v147, %v145
    %v172 = vpack.c.b16 %v148, %v146
    %v173 = vpack.c.b16 %v151, %v149
    %v174 = vpack.c.b16 %v152, %v150
    %v175 = vpack.c.b16 %v155, %v153
    %v176 = vpack.c.b16 %v156, %v154
    %v177 = vpack.c.b16 %v159, %v157
    %v178 = vpack.c.b16 %v160, %v158
    %v179 = vpack.c.b16 %v163, %v161
    %v180 = vpack.c.b16 %v164, %v162
    %197 = vmatpush.bf16.msra.mxu0 %v179
    %198 = vmatpush.bf16.msra.mxu0 %v177
    %199 = vmatpush.bf16.msra.mxu0 %v175
    %200 = vmatpush.bf16.msra.mxu0 %v173
    %201 = vmatpush.bf16.msra.mxu0 %v171
    %202 = vmatpush.bf16.msra.mxu0 %v169
    %203 = vmatpush.bf16.msra.mxu0 %v167
    %204 = vmatpush.bf16.msra.mxu0 %v165
    %205 = vmatmul.bf16.gmra.mxu0 %v94
    %v206 = vpop.f32.mrf.mxu0
    %v207 = vadd.f32 %v113, %v206
    %v208 = vpop.f32.mrf.mxu0
    %209 = vdwg.mxu0
    %210 = vmatpush.bf16.msra.mxu0 %v180
    %211 = vmatpush.bf16.msra.mxu0 %v178
    %212 = vmatpush.bf16.msra.mxu0 %v176
    %213 = vmatpush.bf16.msra.mxu0 %v174
    %214 = vmatpush.bf16.msra.mxu0 %v172
    %215 = vmatpush.bf16.msra.mxu0 %v170
    %216 = vmatpush.bf16.msra.mxu0 %v168
    %217 = vmatpush.bf16.msra.mxu0 %v166
    %218 = vmatmul.bf16.gmra.mxu0 %v94
    %v219 = vpop.f32.mrf.mxu0
    %v220 = vadd.f32 %v114, %v219
    %v221 = vpop.f32.mrf.mxu0
    %222 = vdwg.mxu0
    %v223 = vpack.c.bf16 %v220, %v207
    %v224 = vld [vmem:[%s3] sm:$0xf]
    %s225 = scalar_lea.vmem %s3, 4
    %v226 = vld [vmem:[%s225] sm:$0xf]
    %v228 = vunpack.c.l.b16 %v223
    %v229 = vpack.c.b16 %v228, %v228
    %230 = vrot.lane.b32.xlu0 %v229, 64
    %v231 = vpop.permute.xlu0 %230
    %vm232 = vcmask 15360
    %v234 = vsel %vm232, %v226, 0
    %vm236 = vcmask 1040384
    %v238 = vsel %vm236, %v231, 0
    %240 = vmatpush.bf16.msra.mxu0 0
    %241 = vmatpush.bf16.msra.mxu0 0
    %242 = vmatpush.bf16.msra.mxu0 0
    %243 = vmatpush.bf16.msra.mxu0 0
    %244 = vmatpush.bf16.msra.mxu0 0
    %245 = vmatpush.bf16.msra.mxu0 0
    %246 = vmatpush.bf16.msra.mxu0 0
    %247 = vmatpush.bf16.msra.mxu0 %v238
    %248 = vmatmul.bf16.gmra.mxu0 %v234
    %v249 = vpop.f32.mrf.mxu0
    %v250 = vadd.f32 0.0, %v249
    %v251 = vpop.f32.mrf.mxu0
    %252 = vdwg.mxu0
    %v254 = vsel %vm232, %v224, 0
    %v257 = vsel %vm236, %v223, 0
    %259 = vmatpush.bf16.msra.mxu0 0
    %260 = vmatpush.bf16.msra.mxu0 0
    %261 = vmatpush.bf16.msra.mxu0 0
    %262 = vmatpush.bf16.msra.mxu0 0
    %263 = vmatpush.bf16.msra.mxu0 0
    %264 = vmatpush.bf16.msra.mxu0 0
    %265 = vmatpush.bf16.msra.mxu0 0
    %266 = vmatpush.bf16.msra.mxu0 %v257
    %267 = vmatmul.bf16.gmra.mxu0 %v254
    %v268 = vpop.f32.mrf.mxu0
    %v269 = vadd.f32 %v250, %v268
    %v270 = vpop.f32.mrf.mxu0
    %271 = vdwg.mxu0
    %s272 = scalar_lea.vmem %s3, 8
    %v273 = vld [vmem:[%s272] sm:$0xf]
    %v274 = vunpack.c.h.b16 %v223
    %v275 = vpack.c.b16 %v274, %v274
    %v277 = vsel %vm232, %v273, 0
    %v280 = vsel %vm236, %v275, 0
    %282 = vmatpush.bf16.msra.mxu0 0
    %283 = vmatpush.bf16.msra.mxu0 0
    %284 = vmatpush.bf16.msra.mxu0 0
    %285 = vmatpush.bf16.msra.mxu0 0
    %286 = vmatpush.bf16.msra.mxu0 0
    %287 = vmatpush.bf16.msra.mxu0 0
    %288 = vmatpush.bf16.msra.mxu0 0
    %289 = vmatpush.bf16.msra.mxu0 %v280
    %290 = vmatmul.bf16.gmra.mxu0 %v277
    %v291 = vpop.f32.mrf.mxu0
    %v292 = vadd.f32 0.0, %v291
    %v293 = vpop.f32.mrf.mxu0
    %294 = vdwg.mxu0
    %v295 = vadd.f32 %v269, %v292
    %s296 = scalar_lea.vmem %s3, 12
    %v297 = vld [vmem:[%s296] sm:$0xf]
    %298 = vrot.lane.b32.xlu0 %v275, 64
    %v299 = vpop.permute.xlu0 %298
    %v301 = vsel %vm232, %v297, 0
    %v304 = vsel %vm236, %v299, 0
    %306 = vmatpush.bf16.msra.mxu0 0
    %307 = vmatpush.bf16.msra.mxu0 0
    %308 = vmatpush.bf16.msra.mxu0 0
    %309 = vmatpush.bf16.msra.mxu0 0
    %310 = vmatpush.bf16.msra.mxu0 0
    %311 = vmatpush.bf16.msra.mxu0 0
    %312 = vmatpush.bf16.msra.mxu0 0
    %313 = vmatpush.bf16.msra.mxu0 %v304
    %314 = vmatmul.bf16.gmra.mxu0 %v301
    %v315 = vpop.f32.mrf.mxu0
    %v316 = vadd.f32 0.0, %v315
    %v317 = vpop.f32.mrf.mxu0
    %318 = vdwg.mxu0
    %v319 = vadd.f32 %v295, %v316
    %v320 = vpack.c.bf16 %v319, %v319
    %v321 = vld [vmem:[#allocation2] sm:$0xf]
    %v322 = vld [vmem:[#allocation2 + $0x4] sm:$0xf]
    %v323 = vld [vmem:[#allocation2 + $0x8] sm:$0xf]
    %v324 = vld [vmem:[#allocation2 + $0xc] sm:$0xf]
    %v325 = vld [vmem:[#allocation2 + $0x10] sm:$0xf]
    %v326 = vld [vmem:[#allocation2 + $0x14] sm:$0xf]
    %v327 = vld [vmem:[#allocation2 + $0x18] sm:$0xf]
    %v328 = vld [vmem:[#allocation2 + $0x1c] sm:$0xf]
    %v337 = vunpack.c.l.b16 %v321
    %v338 = vunpack.c.l.b16 %v322
    %v339 = vunpack.c.l.b16 %v323
    %v340 = vunpack.c.l.b16 %v324
    %v341 = vunpack.c.l.b16 %v325
    %v342 = vunpack.c.l.b16 %v326
    %v343 = vunpack.c.l.b16 %v327
    %v344 = vunpack.c.l.b16 %v328
    %v345 = vpack.c.b16 %v338, %v337
    %v346 = vpack.c.b16 %v340, %v339
    %v347 = vpack.c.b16 %v342, %v341
    %v348 = vpack.c.b16 %v344, %v343
    %vm353 = vcmask 523264
    %v355 = vsel %vm353, %v320, 0
    %357 = vmatpush.bf16.msra.mxu0 0
    %358 = vmatpush.bf16.msra.mxu0 0
    %359 = vmatpush.bf16.msra.mxu0 0
    %360 = vmatpush.bf16.msra.mxu0 0
    %361 = vmatpush.bf16.msra.mxu0 %v348
    %362 = vmatpush.bf16.msra.mxu0 %v347
    %363 = vmatpush.bf16.msra.mxu0 %v346
    %364 = vmatpush.bf16.msra.mxu0 %v345
    %365 = vmatmul.bf16.gmra.mxu0 %v355
    %v366 = vpop.f32.mrf.mxu0
    %v367 = vadd.f32 0.0, %v366
    %v368 = vpop.f32.mrf.mxu0
    %369 = vdwg.mxu0
    %v370 = vld [vmem:[%s5] sm:$0xf]
    %v371 = vld [vmem:[%s5 + $0x4] sm:$0xf]
    %v372 = vpack.c.bf16 %v367, %v367
    %s373 = scalar_lea.vmem [#allocation2], 32
    %v374 = vld [vmem:[%s373] sm:$0xf]
    %v375 = vld [vmem:[%s373 + $0x4] sm:$0xf]
    %v376 = vld [vmem:[%s373 + $0x8] sm:$0xf]
    %v377 = vld [vmem:[%s373 + $0xc] sm:$0xf]
    %v378 = vld [vmem:[%s373 + $0x10] sm:$0xf]
    %v379 = vld [vmem:[%s373 + $0x14] sm:$0xf]
    %v380 = vld [vmem:[%s373 + $0x18] sm:$0xf]
    %v381 = vld [vmem:[%s373 + $0x1c] sm:$0xf]
    %v390 = vunpack.c.l.b16 %v374
    %v391 = vunpack.c.l.b16 %v375
    %v392 = vunpack.c.l.b16 %v376
    %v393 = vunpack.c.l.b16 %v377
    %v394 = vunpack.c.l.b16 %v378
    %v395 = vunpack.c.l.b16 %v379
    %v396 = vunpack.c.l.b16 %v380
    %v397 = vunpack.c.l.b16 %v381
    %v398 = vpack.c.b16 %v391, %v390
    %v399 = vpack.c.b16 %v393, %v392
    %v400 = vpack.c.b16 %v395, %v394
    %v401 = vpack.c.b16 %v397, %v396
    %406 = vmatpush.bf16.msra.mxu0 0
    %407 = vmatpush.bf16.msra.mxu0 0
    %408 = vmatpush.bf16.msra.mxu0 0
    %409 = vmatpush.bf16.msra.mxu0 0
    %410 = vmatpush.bf16.msra.mxu0 %v401
    %411 = vmatpush.bf16.msra.mxu0 %v400
    %412 = vmatpush.bf16.msra.mxu0 %v399
    %413 = vmatpush.bf16.msra.mxu0 %v398
    %414 = vmatmul.bf16.gmra.mxu0 %v355
    %v415 = vpop.f32.mrf.mxu0
    %v416 = vadd.f32 0.0, %v415
    %v417 = vpop.f32.mrf.mxu0
    %418 = vdwg.mxu0
    %s419 = scalar_lea.vmem %s5, 8
    %v420 = vld [vmem:[%s419] sm:$0xf]
    %v421 = vld [vmem:[%s419 + $0x4] sm:$0xf]
    %v422 = vpack.c.bf16 %v416, %v416
    %v425 = vunpack.c.l.b16 %v420
    %v426 = vunpack.c.l.b16 %v421
    %v427 = vpack.c.b16 %v426, %v425
    %vm428 = vcmask 64512
    %v430 = vsel %vm428, %v427, 0
    %vm432 = vcmask 1043456
    %v434 = vsel %vm432, %v422, 0
    %436 = vmatpush.bf16.msra.mxu0 0
    %437 = vmatpush.bf16.msra.mxu0 0
    %438 = vmatpush.bf16.msra.mxu0 0
    %439 = vmatpush.bf16.msra.mxu0 0
    %440 = vmatpush.bf16.msra.mxu0 0
    %441 = vmatpush.bf16.msra.mxu0 0
    %442 = vmatpush.bf16.msra.mxu0 0
    %443 = vmatpush.bf16.msra.mxu0 %v434
    %444 = vmatmul.bf16.gmra.mxu0 %v430
    %v445 = vpop.f32.mrf.mxu0
    %v446 = vadd.f32 0.0, %v445
    %v447 = vpop.f32.mrf.mxu0
    %v448 = vadd.f32 0.0, %v447
    %449 = vdwg.mxu0
    %v452 = vunpack.c.l.b16 %v370
    %v453 = vunpack.c.l.b16 %v371
    %v454 = vpack.c.b16 %v453, %v452
    %v456 = vsel %vm428, %v454, 0
    %v459 = vsel %vm432, %v372, 0
    %461 = vmatpush.bf16.msra.mxu0 0
    %462 = vmatpush.bf16.msra.mxu0 0
    %463 = vmatpush.bf16.msra.mxu0 0
    %464 = vmatpush.bf16.msra.mxu0 0
    %465 = vmatpush.bf16.msra.mxu0 0
    %466 = vmatpush.bf16.msra.mxu0 0
    %467 = vmatpush.bf16.msra.mxu0 0
    %468 = vmatpush.bf16.msra.mxu0 %v459
    %469 = vmatmul.bf16.gmra.mxu0 %v456
    %v470 = vpop.f32.mrf.mxu0
    %v471 = vadd.f32 %v446, %v470
    %v472 = vpop.f32.mrf.mxu0
    %v473 = vadd.f32 %v448, %v472
    %474 = vdwg.mxu0
    %s475 = scalar_lea.vmem [#allocation2], 64
    %v476 = vld [vmem:[%s475] sm:$0xf]
    %v477 = vld [vmem:[%s475 + $0x4] sm:$0xf]
    %v478 = vld [vmem:[%s475 + $0x8] sm:$0xf]
    %v479 = vld [vmem:[%s475 + $0xc] sm:$0xf]
    %v480 = vld [vmem:[%s475 + $0x10] sm:$0xf]
    %v481 = vld [vmem:[%s475 + $0x14] sm:$0xf]
    %v482 = vld [vmem:[%s475 + $0x18] sm:$0xf]
    %v483 = vld [vmem:[%s475 + $0x1c] sm:$0xf]
    %v492 = vunpack.c.l.b16 %v476
    %v493 = vunpack.c.l.b16 %v477
    %v494 = vunpack.c.l.b16 %v478
    %v495 = vunpack.c.l.b16 %v479
    %v496 = vunpack.c.l.b16 %v480
    %v497 = vunpack.c.l.b16 %v481
    %v498 = vunpack.c.l.b16 %v482
    %v499 = vunpack.c.l.b16 %v483
    %v500 = vpack.c.b16 %v493, %v492
    %v501 = vpack.c.b16 %v495, %v494
    %v502 = vpack.c.b16 %v497, %v496
    %v503 = vpack.c.b16 %v499, %v498
    %508 = vmatpush.bf16.msra.mxu0 0
    %509 = vmatpush.bf16.msra.mxu0 0
    %510 = vmatpush.bf16.msra.mxu0 0
    %511 = vmatpush.bf16.msra.mxu0 0
    %512 = vmatpush.bf16.msra.mxu0 %v503
    %513 = vmatpush.bf16.msra.mxu0 %v502
    %514 = vmatpush.bf16.msra.mxu0 %v501
    %515 = vmatpush.bf16.msra.mxu0 %v500
    %516 = vmatmul.bf16.gmra.mxu0 %v355
    %v517 = vpop.f32.mrf.mxu0
    %v518 = vadd.f32 0.0, %v517
    %v519 = vpop.f32.mrf.mxu0
    %520 = vdwg.mxu0
    %s521 = scalar_lea.vmem %s5, 16
    %v522 = vld [vmem:[%s521] sm:$0xf]
    %v523 = vld [vmem:[%s521 + $0x4] sm:$0xf]
    %v524 = vpack.c.bf16 %v518, %v518
    %v527 = vunpack.c.l.b16 %v522
    %v528 = vunpack.c.l.b16 %v523
    %v529 = vpack.c.b16 %v528, %v527
    %v531 = vsel %vm428, %v529, 0
    %v534 = vsel %vm432, %v524, 0
    %536 = vmatpush.bf16.msra.mxu0 0
    %537 = vmatpush.bf16.msra.mxu0 0
    %538 = vmatpush.bf16.msra.mxu0 0
    %539 = vmatpush.bf16.msra.mxu0 0
    %540 = vmatpush.bf16.msra.mxu0 0
    %541 = vmatpush.bf16.msra.mxu0 0
    %542 = vmatpush.bf16.msra.mxu0 0
    %543 = vmatpush.bf16.msra.mxu0 %v534
    %544 = vmatmul.bf16.gmra.mxu0 %v531
    %v545 = vpop.f32.mrf.mxu0
    %v546 = vadd.f32 0.0, %v545
    %v547 = vpop.f32.mrf.mxu0
    %v548 = vadd.f32 0.0, %v547
    %549 = vdwg.mxu0
    %v550 = vadd.f32 %v471, %v546
    %v551 = vadd.f32 %v473, %v548
    %s552 = scalar_lea.vmem [#allocation2], 96
    %v553 = vld [vmem:[%s552] sm:$0xf]
    %v554 = vld [vmem:[%s552 + $0x4] sm:$0xf]
    %v555 = vld [vmem:[%s552 + $0x8] sm:$0xf]
    %v556 = vld [vmem:[%s552 + $0xc] sm:$0xf]
    %v557 = vld [vmem:[%s552 + $0x10] sm:$0xf]
    %v558 = vld [vmem:[%s552 + $0x14] sm:$0xf]
    %v559 = vld [vmem:[%s552 + $0x18] sm:$0xf]
    %v560 = vld [vmem:[%s552 + $0x1c] sm:$0xf]
    %v569 = vunpack.c.l.b16 %v553
    %v570 = vunpack.c.l.b16 %v554
    %v571 = vunpack.c.l.b16 %v555
    %v572 = vunpack.c.l.b16 %v556
    %v573 = vunpack.c.l.b16 %v557
    %v574 = vunpack.c.l.b16 %v558
    %v575 = vunpack.c.l.b16 %v559
    %v576 = vunpack.c.l.b16 %v560
    %v577 = vpack.c.b16 %v570, %v569
    %v578 = vpack.c.b16 %v572, %v571
    %v579 = vpack.c.b16 %v574, %v573
    %v580 = vpack.c.b16 %v576, %v575
    %585 = vmatpush.bf16.msra.mxu0 0
    %586 = vmatpush.bf16.msra.mxu0 0
    %587 = vmatpush.bf16.msra.mxu0 0
    %588 = vmatpush.bf16.msra.mxu0 0
    %589 = vmatpush.bf16.msra.mxu0 %v580
    %590 = vmatpush.bf16.msra.mxu0 %v579
    %591 = vmatpush.bf16.msra.mxu0 %v578
    %592 = vmatpush.bf16.msra.mxu0 %v577
    %593 = vmatmul.bf16.gmra.mxu0 %v355
    %v594 = vpop.f32.mrf.mxu0
    %v595 = vadd.f32 0.0, %v594
    %v596 = vpop.f32.mrf.mxu0
    %597 = vdwg.mxu0
    %s598 = scalar_lea.vmem %s5, 24
    %v599 = vld [vmem:[%s598] sm:$0xf]
    %v600 = vld [vmem:[%s598 + $0x4] sm:$0xf]
    %v601 = vpack.c.bf16 %v595, %v595
    %v604 = vunpack.c.l.b16 %v599
    %v605 = vunpack.c.l.b16 %v600
    %v606 = vpack.c.b16 %v605, %v604
    %v608 = vsel %vm428, %v606, 0
    %v611 = vsel %vm432, %v601, 0
    %613 = vmatpush.bf16.msra.mxu0 0
    %614 = vmatpush.bf16.msra.mxu0 0
    %615 = vmatpush.bf16.msra.mxu0 0
    %616 = vmatpush.bf16.msra.mxu0 0
    %617 = vmatpush.bf16.msra.mxu0 0
    %618 = vmatpush.bf16.msra.mxu0 0
    %619 = vmatpush.bf16.msra.mxu0 0
    %620 = vmatpush.bf16.msra.mxu0 %v611
    %621 = vmatmul.bf16.gmra.mxu0 %v608
    %v622 = vpop.f32.mrf.mxu0
    %v623 = vadd.f32 0.0, %v622
    %v624 = vpop.f32.mrf.mxu0
    %v625 = vadd.f32 0.0, %v624
    %626 = vdwg.mxu0
    %v627 = vadd.f32 %v550, %v623
    %v628 = vadd.f32 %v551, %v625
    %v629 = vld [vmem:[%s6] sm:$0x1]
    %v631 = vperm.slane %v629, 0
    %v633 = vadd.f32 %v627, %v631
    %v634 = vadd.f32 %v628, %v631
    %v635 = vmax.f32 %v633, 0.0
    %v636 = vmax.f32 %v634, 0.0
    %v637 = vpack.c.bf16 %v636, %v635
    %v638 = vld [vmem:[#allocation5] sm:$0xf]
    %v639 = vld [vmem:[#allocation5 + $0x4] sm:$0xf]
    %v640 = vld [vmem:[#allocation5 + $0x8] sm:$0xf]
    %v641 = vld [vmem:[#allocation5 + $0xc] sm:$0xf]
    %v642 = vld [vmem:[#allocation5 + $0x10] sm:$0xf]
    %v643 = vld [vmem:[#allocation5 + $0x14] sm:$0xf]
    %v644 = vld [vmem:[#allocation5 + $0x18] sm:$0xf]
    %v645 = vld [vmem:[#allocation5 + $0x1c] sm:$0xf]
    %v654 = vunpack.c.l.b16 %v638
    %v655 = vunpack.c.l.b16 %v639
    %v656 = vunpack.c.l.b16 %v640
    %v657 = vunpack.c.l.b16 %v641
    %v658 = vunpack.c.l.b16 %v642
    %v659 = vunpack.c.l.b16 %v643
    %v660 = vunpack.c.l.b16 %v644
    %v661 = vunpack.c.l.b16 %v645
    %v662 = vpack.c.b16 %v655, %v654
    %v663 = vpack.c.b16 %v657, %v656
    %v664 = vpack.c.b16 %v659, %v658
    %v665 = vpack.c.b16 %v661, %v660
    %v671 = vsel %vm353, %v637, 0
    %673 = vmatpush.bf16.msra.mxu0 0
    %674 = vmatpush.bf16.msra.mxu0 0
    %675 = vmatpush.bf16.msra.mxu0 0
    %676 = vmatpush.bf16.msra.mxu0 0
    %677 = vmatpush.bf16.msra.mxu0 %v665
    %678 = vmatpush.bf16.msra.mxu0 %v664
    %679 = vmatpush.bf16.msra.mxu0 %v663
    %680 = vmatpush.bf16.msra.mxu0 %v662
    %681 = vmatmul.bf16.gmra.mxu0 %v671
    %v682 = vpop.f32.mrf.mxu0
    %v683 = vadd.f32 0.0, %v682
    %v684 = vpop.f32.mrf.mxu0
    %v685 = vadd.f32 0.0, %v684
    %686 = vdwg.mxu0
    %v687 = vld [vmem:[%s8] sm:$0xf]
    %v688 = vld [vmem:[%s8 + $0x4] sm:$0xf]
    %v689 = vld [vmem:[%s8 + $0x8] sm:$0xf]
    %v690 = vld [vmem:[%s8 + $0xc] sm:$0xf]
    %v691 = vpack.c.bf16 %v685, %v683
    %s692 = scalar_lea.vmem [#allocation5], 32
    %v693 = vld [vmem:[%s692] sm:$0xf]
    %v694 = vld [vmem:[%s692 + $0x4] sm:$0xf]
    %v695 = vld [vmem:[%s692 + $0x8] sm:$0xf]
    %v696 = vld [vmem:[%s692 + $0xc] sm:$0xf]
    %v697 = vld [vmem:[%s692 + $0x10] sm:$0xf]
    %v698 = vld [vmem:[%s692 + $0x14] sm:$0xf]
    %v699 = vld [vmem:[%s692 + $0x18] sm:$0xf]
    %v700 = vld [vmem:[%s692 + $0x1c] sm:$0xf]
    %v709 = vunpack.c.l.b16 %v693
    %v710 = vunpack.c.l.b16 %v694
    %v711 = vunpack.c.l.b16 %v695
    %v712 = vunpack.c.l.b16 %v696
    %v713 = vunpack.c.l.b16 %v697
    %v714 = vunpack.c.l.b16 %v698
    %v715 = vunpack.c.l.b16 %v699
    %v716 = vunpack.c.l.b16 %v700
    %v717 = vpack.c.b16 %v710, %v709
    %v718 = vpack.c.b16 %v712, %v711
    %v719 = vpack.c.b16 %v714, %v713
    %v720 = vpack.c.b16 %v716, %v715
    %725 = vmatpush.bf16.msra.mxu0 0
    %726 = vmatpush.bf16.msra.mxu0 0
    %727 = vmatpush.bf16.msra.mxu0 0
    %728 = vmatpush.bf16.msra.mxu0 0
    %729 = vmatpush.bf16.msra.mxu0 %v720
    %730 = vmatpush.bf16.msra.mxu0 %v719
    %731 = vmatpush.bf16.msra.mxu0 %v718
    %732 = vmatpush.bf16.msra.mxu0 %v717
    %733 = vmatmul.bf16.gmra.mxu0 %v671
    %v734 = vpop.f32.mrf.mxu0
    %v735 = vadd.f32 0.0, %v734
    %v736 = vpop.f32.mrf.mxu0
    %v737 = vadd.f32 0.0, %v736
    %738 = vdwg.mxu0
    %s739 = scalar_lea.vmem %s8, 16
    %v740 = vld [vmem:[%s739] sm:$0xf]
    %v741 = vld [vmem:[%s739 + $0x4] sm:$0xf]
    %v742 = vld [vmem:[%s739 + $0x8] sm:$0xf]
    %v743 = vld [vmem:[%s739 + $0xc] sm:$0xf]
    %v744 = vpack.c.bf16 %v737, %v735
    %v749 = vunpack.c.l.b16 %v740
    %v750 = vunpack.c.l.b16 %v741
    %v751 = vunpack.c.l.b16 %v742
    %v752 = vunpack.c.l.b16 %v743
    %v753 = vpack.c.b16 %v750, %v749
    %v754 = vpack.c.b16 %v752, %v751
    %vm755 = vcmask 130048
    %v757 = vsel %vm755, %v753, 0
    %v760 = vsel %vm755, %v754, 0
    %762 = vmatpush.bf16.msra.mxu0 0
    %763 = vmatpush.bf16.msra.mxu0 0
    %764 = vmatpush.bf16.msra.mxu0 0
    %765 = vmatpush.bf16.msra.mxu0 0
    %766 = vmatpush.bf16.msra.mxu0 0
    %767 = vmatpush.bf16.msra.mxu0 0
    %768 = vmatpush.bf16.msra.mxu0 0
    %769 = vmatpush.bf16.msra.mxu0 %v744
    %770 = vmatmul.bf16.gmra.mxu0 %v757
    %v771 = vpop.f32.mrf.mxu0
    %v772 = vadd.f32 0.0, %v771
    %v773 = vpop.f32.mrf.mxu0
    %v774 = vadd.f32 0.0, %v773
    %775 = vmatmul.bf16.gmra.mxu0 %v760
    %v776 = vpop.f32.mrf.mxu0
    %v777 = vadd.f32 0.0, %v776
    %v778 = vpop.f32.mrf.mxu0
    %v779 = vadd.f32 0.0, %v778
    %780 = vdwg.mxu0
    %v785 = vunpack.c.l.b16 %v687
    %v786 = vunpack.c.l.b16 %v688
    %v787 = vunpack.c.l.b16 %v689
    %v788 = vunpack.c.l.b16 %v690
    %v789 = vpack.c.b16 %v786, %v785
    %v790 = vpack.c.b16 %v788, %v787
    %v792 = vsel %vm755, %v789, 0
    %v795 = vsel %vm755, %v790, 0
    %797 = vmatpush.bf16.msra.mxu0 0
    %798 = vmatpush.bf16.msra.mxu0 0
    %799 = vmatpush.bf16.msra.mxu0 0
    %800 = vmatpush.bf16.msra.mxu0 0
    %801 = vmatpush.bf16.msra.mxu0 0
    %802 = vmatpush.bf16.msra.mxu0 0
    %803 = vmatpush.bf16.msra.mxu0 0
    %804 = vmatpush.bf16.msra.mxu0 %v691
    %805 = vmatmul.bf16.gmra.mxu0 %v792
    %v806 = vpop.f32.mrf.mxu0
    %v807 = vadd.f32 %v772, %v806
    %v808 = vpop.f32.mrf.mxu0
    %v809 = vadd.f32 %v774, %v808
    %810 = vmatmul.bf16.gmra.mxu0 %v795
    %v811 = vpop.f32.mrf.mxu0
    %v812 = vadd.f32 %v777, %v811
    %v813 = vpop.f32.mrf.mxu0
    %v814 = vadd.f32 %v779, %v813
    %815 = vdwg.mxu0
    %s816 = scalar_lea.vmem [#allocation5], 64
    %v817 = vld [vmem:[%s816] sm:$0xf]
    %v818 = vld [vmem:[%s816 + $0x4] sm:$0xf]
    %v819 = vld [vmem:[%s816 + $0x8] sm:$0xf]
    %v820 = vld [vmem:[%s816 + $0xc] sm:$0xf]
    %v821 = vld [vmem:[%s816 + $0x10] sm:$0xf]
    %v822 = vld [vmem:[%s816 + $0x14] sm:$0xf]
    %v823 = vld [vmem:[%s816 + $0x18] sm:$0xf]
    %v824 = vld [vmem:[%s816 + $0x1c] sm:$0xf]
    %v833 = vunpack.c.l.b16 %v817
    %v834 = vunpack.c.l.b16 %v818
    %v835 = vunpack.c.l.b16 %v819
    %v836 = vunpack.c.l.b16 %v820
    %v837 = vunpack.c.l.b16 %v821
    %v838 = vunpack.c.l.b16 %v822
    %v839 = vunpack.c.l.b16 %v823
    %v840 = vunpack.c.l.b16 %v824
    %v841 = vpack.c.b16 %v834, %v833
    %v842 = vpack.c.b16 %v836, %v835
    %v843 = vpack.c.b16 %v838, %v837
    %v844 = vpack.c.b16 %v840, %v839
    %849 = vmatpush.bf16.msra.mxu0 0
    %850 = vmatpush.bf16.msra.mxu0 0
    %851 = vmatpush.bf16.msra.mxu0 0
    %852 = vmatpush.bf16.msra.mxu0 0
    %853 = vmatpush.bf16.msra.mxu0 %v844
    %854 = vmatpush.bf16.msra.mxu0 %v843
    %855 = vmatpush.bf16.msra.mxu0 %v842
    %856 = vmatpush.bf16.msra.mxu0 %v841
    %857 = vmatmul.bf16.gmra.mxu0 %v671
    %v858 = vpop.f32.mrf.mxu0
    %v859 = vadd.f32 0.0, %v858
    %v860 = vpop.f32.mrf.mxu0
    %v861 = vadd.f32 0.0, %v860
    %862 = vdwg.mxu0
    %s863 = scalar_lea.vmem %s8, 32
    %v864 = vld [vmem:[%s863] sm:$0xf]
    %v865 = vld [vmem:[%s863 + $0x4] sm:$0xf]
    %v866 = vld [vmem:[%s863 + $0x8] sm:$0xf]
    %v867 = vld [vmem:[%s863 + $0xc] sm:$0xf]
    %v868 = vpack.c.bf16 %v861, %v859
    %v873 = vunpack.c.l.b16 %v864
    %v874 = vunpack.c.l.b16 %v865
    %v875 = vunpack.c.l.b16 %v866
    %v876 = vunpack.c.l.b16 %v867
    %v877 = vpack.c.b16 %v874, %v873
    %v878 = vpack.c.b16 %v876, %v875
    %v880 = vsel %vm755, %v877, 0
    %v883 = vsel %vm755, %v878, 0
    %885 = vmatpush.bf16.msra.mxu0 0
    %886 = vmatpush.bf16.msra.mxu0 0
    %887 = vmatpush.bf16.msra.mxu0 0
    %888 = vmatpush.bf16.msra.mxu0 0
    %889 = vmatpush.bf16.msra.mxu0 0
    %890 = vmatpush.bf16.msra.mxu0 0
    %891 = vmatpush.bf16.msra.mxu0 0
    %892 = vmatpush.bf16.msra.mxu0 %v868
    %893 = vmatmul.bf16.gmra.mxu0 %v880
    %v894 = vpop.f32.mrf.mxu0
    %v895 = vadd.f32 0.0, %v894
    %v896 = vpop.f32.mrf.mxu0
    %v897 = vadd.f32 0.0, %v896
    %898 = vmatmul.bf16.gmra.mxu0 %v883
    %v899 = vpop.f32.mrf.mxu0
    %v900 = vadd.f32 0.0, %v899
    %v901 = vpop.f32.mrf.mxu0
    %v902 = vadd.f32 0.0, %v901
    %903 = vdwg.mxu0
    %v904 = vadd.f32 %v807, %v895
    %v905 = vadd.f32 %v809, %v897
    %v906 = vadd.f32 %v812, %v900
    %v907 = vadd.f32 %v814, %v902
    %s908 = scalar_lea.vmem [#allocation5], 96
    %v909 = vld [vmem:[%s908] sm:$0xf]
    %v910 = vld [vmem:[%s908 + $0x4] sm:$0xf]
    %v911 = vld [vmem:[%s908 + $0x8] sm:$0xf]
    %v912 = vld [vmem:[%s908 + $0xc] sm:$0xf]
    %v913 = vld [vmem:[%s908 + $0x10] sm:$0xf]
    %v914 = vld [vmem:[%s908 + $0x14] sm:$0xf]
    %v915 = vld [vmem:[%s908 + $0x18] sm:$0xf]
    %v916 = vld [vmem:[%s908 + $0x1c] sm:$0xf]
    %v925 = vunpack.c.l.b16 %v909
    %v926 = vunpack.c.l.b16 %v910
    %v927 = vunpack.c.l.b16 %v911
    %v928 = vunpack.c.l.b16 %v912
    %v929 = vunpack.c.l.b16 %v913
    %v930 = vunpack.c.l.b16 %v914
    %v931 = vunpack.c.l.b16 %v915
    %v932 = vunpack.c.l.b16 %v916
    %v933 = vpack.c.b16 %v926, %v925
    %v934 = vpack.c.b16 %v928, %v927
    %v935 = vpack.c.b16 %v930, %v929
    %v936 = vpack.c.b16 %v932, %v931
    %941 = vmatpush.bf16.msra.mxu0 0
    %942 = vmatpush.bf16.msra.mxu0 0
    %943 = vmatpush.bf16.msra.mxu0 0
    %944 = vmatpush.bf16.msra.mxu0 0
    %945 = vmatpush.bf16.msra.mxu0 %v936
    %946 = vmatpush.bf16.msra.mxu0 %v935
    %947 = vmatpush.bf16.msra.mxu0 %v934
    %948 = vmatpush.bf16.msra.mxu0 %v933
    %949 = vmatmul.bf16.gmra.mxu0 %v671
    %v950 = vpop.f32.mrf.mxu0
    %v951 = vadd.f32 0.0, %v950
    %v952 = vpop.f32.mrf.mxu0
    %v953 = vadd.f32 0.0, %v952
    %954 = vdwg.mxu0
    %s955 = scalar_lea.vmem %s8, 48
    %v956 = vld [vmem:[%s955] sm:$0xf]
    %v957 = vld [vmem:[%s955 + $0x4] sm:$0xf]
    %v958 = vld [vmem:[%s955 + $0x8] sm:$0xf]
    %v959 = vld [vmem:[%s955 + $0xc] sm:$0xf]
    %v960 = vpack.c.bf16 %v953, %v951
    %v965 = vunpack.c.l.b16 %v956
    %v966 = vunpack.c.l.b16 %v957
    %v967 = vunpack.c.l.b16 %v958
    %v968 = vunpack.c.l.b16 %v959
    %v969 = vpack.c.b16 %v966, %v965
    %v970 = vpack.c.b16 %v968, %v967
    %v972 = vsel %vm755, %v969, 0
    %v975 = vsel %vm755, %v970, 0
    %977 = vmatpush.bf16.msra.mxu0 0
    %978 = vmatpush.bf16.msra.mxu0 0
    %979 = vmatpush.bf16.msra.mxu0 0
    %980 = vmatpush.bf16.msra.mxu0 0
    %981 = vmatpush.bf16.msra.mxu0 0
    %982 = vmatpush.bf16.msra.mxu0 0
    %983 = vmatpush.bf16.msra.mxu0 0
    %984 = vmatpush.bf16.msra.mxu0 %v960
    %985 = vmatmul.bf16.gmra.mxu0 %v972
    %v986 = vpop.f32.mrf.mxu0
    %v987 = vadd.f32 0.0, %v986
    %v988 = vpop.f32.mrf.mxu0
    %v989 = vadd.f32 0.0, %v988
    %990 = vmatmul.bf16.gmra.mxu0 %v975
    %v991 = vpop.f32.mrf.mxu0
    %v992 = vadd.f32 0.0, %v991
    %v993 = vpop.f32.mrf.mxu0
    %v994 = vadd.f32 0.0, %v993
    %995 = vdwg.mxu0
    %v996 = vadd.f32 %v904, %v987
    %v997 = vadd.f32 %v905, %v989
    %v998 = vadd.f32 %v906, %v992
    %v999 = vadd.f32 %v907, %v994
    %v1000 = vld [vmem:[%s9] sm:$0x1]
    %v1002 = vperm.slane %v1000, 0
    %v1004 = vadd.f32 %v996, %v1002
    %v1005 = vadd.f32 %v997, %v1002
    %v1006 = vadd.f32 %v998, %v1002
    %v1007 = vadd.f32 %v999, %v1002
    %v1008 = vmax.f32 %v1004, 0.0
    %v1009 = vmax.f32 %v1005, 0.0
    %v1010 = vmax.f32 %v1006, 0.0
    %v1011 = vmax.f32 %v1007, 0.0
    %v1012 = vpack.c.bf16 %v1009, %v1008
    %v1013 = vpack.c.bf16 %v1011, %v1010
    %v1014 = vld [vmem:[#allocation7] sm:$0xf]
    %v1015 = vld [vmem:[#allocation7 + $0x4] sm:$0xf]
    %v1016 = vld [vmem:[#allocation7 + $0x8] sm:$0xf]
    %v1017 = vld [vmem:[#allocation7 + $0xc] sm:$0xf]
    %v1018 = vld [vmem:[#allocation7 + $0x10] sm:$0xf]
    %v1019 = vld [vmem:[#allocation7 + $0x14] sm:$0xf]
    %v1020 = vld [vmem:[#allocation7 + $0x18] sm:$0xf]
    %v1021 = vld [vmem:[#allocation7 + $0x1c] sm:$0xf]
    %v1030 = vunpack.c.l.b16 %v1014
    %v1031 = vunpack.c.l.b16 %v1015
    %v1032 = vunpack.c.l.b16 %v1016
    %v1033 = vunpack.c.l.b16 %v1017
    %v1034 = vunpack.c.l.b16 %v1018
    %v1035 = vunpack.c.l.b16 %v1019
    %v1036 = vunpack.c.l.b16 %v1020
    %v1037 = vunpack.c.l.b16 %v1021
    %v1038 = vpack.c.b16 %v1031, %v1030
    %v1039 = vpack.c.b16 %v1033, %v1032
    %v1040 = vpack.c.b16 %v1035, %v1034
    %v1041 = vpack.c.b16 %v1037, %v1036
    %v1047 = vsel %vm353, %v1012, 0
    %v1050 = vsel %vm353, %v1013, 0
    %1052 = vmatpush.bf16.msra.mxu0 0
    %1053 = vmatpush.bf16.msra.mxu0 0
    %1054 = vmatpush.bf16.msra.mxu0 0
    %1055 = vmatpush.bf16.msra.mxu0 0
    %1056 = vmatpush.bf16.msra.mxu0 %v1041
    %1057 = vmatpush.bf16.msra.mxu0 %v1040
    %1058 = vmatpush.bf16.msra.mxu0 %v1039
    %1059 = vmatpush.bf16.msra.mxu0 %v1038
    %1060 = vmatmul.bf16.gmra.mxu0 %v1047
    %v1061 = vpop.f32.mrf.mxu0
    %v1062 = vadd.f32 0.0, %v1061
    %v1063 = vpop.f32.mrf.mxu0
    %v1064 = vadd.f32 0.0, %v1063
    %1065 = vmatmul.bf16.gmra.mxu0 %v1050
    %v1066 = vpop.f32.mrf.mxu0
    %v1067 = vadd.f32 0.0, %v1066
    %v1068 = vpop.f32.mrf.mxu0
    %v1069 = vadd.f32 0.0, %v1068
    %1070 = vdwg.mxu0
    %v1071 = vld [vmem:[%s11] sm:$0xf]
    %v1072 = vld [vmem:[%s11 + $0x4] sm:$0xf]
    %v1073 = vld [vmem:[%s11 + $0x8] sm:$0xf]
    %v1074 = vld [vmem:[%s11 + $0xc] sm:$0xf]
    %v1075 = vld [vmem:[%s11 + $0x10] sm:$0xf]
    %v1076 = vld [vmem:[%s11 + $0x14] sm:$0xf]
    %v1077 = vld [vmem:[%s11 + $0x18] sm:$0xf]
    %v1078 = vld [vmem:[%s11 + $0x1c] sm:$0xf]
    %v1079 = vpack.c.bf16 %v1064, %v1062
    %v1080 = vpack.c.bf16 %v1069, %v1067
    %s1081 = scalar_lea.vmem [#allocation7], 32
    %v1082 = vld [vmem:[%s1081] sm:$0xf]
    %v1083 = vld [vmem:[%s1081 + $0x4] sm:$0xf]
    %v1084 = vld [vmem:[%s1081 + $0x8] sm:$0xf]
    %v1085 = vld [vmem:[%s1081 + $0xc] sm:$0xf]
    %v1086 = vld [vmem:[%s1081 + $0x10] sm:$0xf]
    %v1087 = vld [vmem:[%s1081 + $0x14] sm:$0xf]
    %v1088 = vld [vmem:[%s1081 + $0x18] sm:$0xf]
    %v1089 = vld [vmem:[%s1081 + $0x1c] sm:$0xf]
    %v1098 = vunpack.c.l.b16 %v1082
    %v1099 = vunpack.c.l.b16 %v1083
    %v1100 = vunpack.c.l.b16 %v1084
    %v1101 = vunpack.c.l.b16 %v1085
    %v1102 = vunpack.c.l.b16 %v1086
    %v1103 = vunpack.c.l.b16 %v1087
    %v1104 = vunpack.c.l.b16 %v1088
    %v1105 = vunpack.c.l.b16 %v1089
    %v1106 = vpack.c.b16 %v1099, %v1098
    %v1107 = vpack.c.b16 %v1101, %v1100
    %v1108 = vpack.c.b16 %v1103, %v1102
    %v1109 = vpack.c.b16 %v1105, %v1104
    %1114 = vmatpush.bf16.msra.mxu0 0
    %1115 = vmatpush.bf16.msra.mxu0 0
    %1116 = vmatpush.bf16.msra.mxu0 0
    %1117 = vmatpush.bf16.msra.mxu0 0
    %1118 = vmatpush.bf16.msra.mxu0 %v1109
    %1119 = vmatpush.bf16.msra.mxu0 %v1108
    %1120 = vmatpush.bf16.msra.mxu0 %v1107
    %1121 = vmatpush.bf16.msra.mxu0 %v1106
    %1122 = vmatmul.bf16.gmra.mxu0 %v1047
    %v1123 = vpop.f32.mrf.mxu0
    %v1124 = vadd.f32 0.0, %v1123
    %v1125 = vpop.f32.mrf.mxu0
    %v1126 = vadd.f32 0.0, %v1125
    %1127 = vmatmul.bf16.gmra.mxu0 %v1050
    %v1128 = vpop.f32.mrf.mxu0
    %v1129 = vadd.f32 0.0, %v1128
    %v1130 = vpop.f32.mrf.mxu0
    %v1131 = vadd.f32 0.0, %v1130
    %1132 = vdwg.mxu0
    %s1133 = scalar_lea.vmem %s11, 32
    %v1134 = vld [vmem:[%s1133] sm:$0xf]
    %v1135 = vld [vmem:[%s1133 + $0x4] sm:$0xf]
    %v1136 = vld [vmem:[%s1133 + $0x8] sm:$0xf]
    %v1137 = vld [vmem:[%s1133 + $0xc] sm:$0xf]
    %v1138 = vld [vmem:[%s1133 + $0x10] sm:$0xf]
    %v1139 = vld [vmem:[%s1133 + $0x14] sm:$0xf]
    %v1140 = vld [vmem:[%s1133 + $0x18] sm:$0xf]
    %v1141 = vld [vmem:[%s1133 + $0x1c] sm:$0xf]
    %v1142 = vpack.c.bf16 %v1126, %v1124
    %v1143 = vpack.c.bf16 %v1131, %v1129
    %v1152 = vunpack.c.l.b16 %v1134
    %v1153 = vunpack.c.l.b16 %v1135
    %v1154 = vunpack.c.l.b16 %v1136
    %v1155 = vunpack.c.l.b16 %v1137
    %v1156 = vunpack.c.l.b16 %v1138
    %v1157 = vunpack.c.l.b16 %v1139
    %v1158 = vunpack.c.l.b16 %v1140
    %v1159 = vunpack.c.l.b16 %v1141
    %v1160 = vpack.c.b16 %v1153, %v1152
    %v1161 = vpack.c.b16 %v1155, %v1154
    %v1162 = vpack.c.b16 %v1157, %v1156
    %v1163 = vpack.c.b16 %v1159, %v1158
    %vm1164 = vcmask 261120
    %v1166 = vsel %vm1164, %v1160, 0
    %v1169 = vsel %vm1164, %v1161, 0
    %v1172 = vsel %vm1164, %v1162, 0
    %v1175 = vsel %vm1164, %v1163, 0
    %1177 = vmatpush.bf16.msra.mxu0 0
    %1178 = vmatpush.bf16.msra.mxu0 0
    %1179 = vmatpush.bf16.msra.mxu0 0
    %1180 = vmatpush.bf16.msra.mxu0 0
    %1181 = vmatpush.bf16.msra.mxu0 0
    %1182 = vmatpush.bf16.msra.mxu0 0
    %1183 = vmatpush.bf16.msra.mxu0 %v1143
    %1184 = vmatpush.bf16.msra.mxu0 %v1142
    %1185 = vmatmul.bf16.gmra.mxu0 %v1166
    %v1186 = vpop.f32.mrf.mxu0
    %v1187 = vadd.f32 0.0, %v1186
    %v1188 = vpop.f32.mrf.mxu0
    %v1189 = vadd.f32 0.0, %v1188
    %1190 = vmatmul.bf16.gmra.mxu0 %v1169
    %v1191 = vpop.f32.mrf.mxu0
    %v1192 = vadd.f32 0.0, %v1191
    %v1193 = vpop.f32.mrf.mxu0
    %v1194 = vadd.f32 0.0, %v1193
    %1195 = vmatmul.bf16.gmra.mxu0 %v1172
    %v1196 = vpop.f32.mrf.mxu0
    %v1197 = vadd.f32 0.0, %v1196
    %v1198 = vpop.f32.mrf.mxu0
    %v1199 = vadd.f32 0.0, %v1198
    %1200 = vmatmul.bf16.gmra.mxu0 %v1175
    %v1201 = vpop.f32.mrf.mxu0
    %v1202 = vadd.f32 0.0, %v1201
    %v1203 = vpop.f32.mrf.mxu0
    %v1204 = vadd.f32 0.0, %v1203
    %1205 = vdwg.mxu0
    %v1214 = vunpack.c.l.b16 %v1071
    %v1215 = vunpack.c.l.b16 %v1072
    %v1216 = vunpack.c.l.b16 %v1073
    %v1217 = vunpack.c.l.b16 %v1074
    %v1218 = vunpack.c.l.b16 %v1075
    %v1219 = vunpack.c.l.b16 %v1076
    %v1220 = vunpack.c.l.b16 %v1077
    %v1221 = vunpack.c.l.b16 %v1078
    %v1222 = vpack.c.b16 %v1215, %v1214
    %v1223 = vpack.c.b16 %v1217, %v1216
    %v1224 = vpack.c.b16 %v1219, %v1218
    %v1225 = vpack.c.b16 %v1221, %v1220
    %v1227 = vsel %vm1164, %v1222, 0
    %v1230 = vsel %vm1164, %v1223, 0
    %v1233 = vsel %vm1164, %v1224, 0
    %v1236 = vsel %vm1164, %v1225, 0
    %1238 = vmatpush.bf16.msra.mxu0 0
    %1239 = vmatpush.bf16.msra.mxu0 0
    %1240 = vmatpush.bf16.msra.mxu0 0
    %1241 = vmatpush.bf16.msra.mxu0 0
    %1242 = vmatpush.bf16.msra.mxu0 0
    %1243 = vmatpush.bf16.msra.mxu0 0
    %1244 = vmatpush.bf16.msra.mxu0 %v1080
    %1245 = vmatpush.bf16.msra.mxu0 %v1079
    %1246 = vmatmul.bf16.gmra.mxu0 %v1227
    %v1247 = vpop.f32.mrf.mxu0
    %v1248 = vadd.f32 %v1187, %v1247
    %v1249 = vpop.f32.mrf.mxu0
    %v1250 = vadd.f32 %v1189, %v1249
    %1251 = vmatmul.bf16.gmra.mxu0 %v1230
    %v1252 = vpop.f32.mrf.mxu0
    %v1253 = vadd.f32 %v1192, %v1252
    %v1254 = vpop.f32.mrf.mxu0
    %v1255 = vadd.f32 %v1194, %v1254
    %1256 = vmatmul.bf16.gmra.mxu0 %v1233
    %v1257 = vpop.f32.mrf.mxu0
    %v1258 = vadd.f32 %v1197, %v1257
    %v1259 = vpop.f32.mrf.mxu0
    %v1260 = vadd.f32 %v1199, %v1259
    %1261 = vmatmul.bf16.gmra.mxu0 %v1236
    %v1262 = vpop.f32.mrf.mxu0
    %v1263 = vadd.f32 %v1202, %v1262
    %v1264 = vpop.f32.mrf.mxu0
    %v1265 = vadd.f32 %v1204, %v1264
    %1266 = vdwg.mxu0
    %s1267 = scalar_lea.vmem [#allocation7], 64
    %v1268 = vld [vmem:[%s1267] sm:$0xf]
    %v1269 = vld [vmem:[%s1267 + $0x4] sm:$0xf]
    %v1270 = vld [vmem:[%s1267 + $0x8] sm:$0xf]
    %v1271 = vld [vmem:[%s1267 + $0xc] sm:$0xf]
    %v1272 = vld [vmem:[%s1267 + $0x10] sm:$0xf]
    %v1273 = vld [vmem:[%s1267 + $0x14] sm:$0xf]
    %v1274 = vld [vmem:[%s1267 + $0x18] sm:$0xf]
    %v1275 = vld [vmem:[%s1267 + $0x1c] sm:$0xf]
    %v1284 = vunpack.c.l.b16 %v1268
    %v1285 = vunpack.c.l.b16 %v1269
    %v1286 = vunpack.c.l.b16 %v1270
    %v1287 = vunpack.c.l.b16 %v1271
    %v1288 = vunpack.c.l.b16 %v1272
    %v1289 = vunpack.c.l.b16 %v1273
    %v1290 = vunpack.c.l.b16 %v1274
    %v1291 = vunpack.c.l.b16 %v1275
    %v1292 = vpack.c.b16 %v1285, %v1284
    %v1293 = vpack.c.b16 %v1287, %v1286
    %v1294 = vpack.c.b16 %v1289, %v1288
    %v1295 = vpack.c.b16 %v1291, %v1290
    %1300 = vmatpush.bf16.msra.mxu0 0
    %1301 = vmatpush.bf16.msra.mxu0 0
    %1302 = vmatpush.bf16.msra.mxu0 0
    %1303 = vmatpush.bf16.msra.mxu0 0
    %1304 = vmatpush.bf16.msra.mxu0 %v1295
    %1305 = vmatpush.bf16.msra.mxu0 %v1294
    %1306 = vmatpush.bf16.msra.mxu0 %v1293
    %1307 = vmatpush.bf16.msra.mxu0 %v1292
    %1308 = vmatmul.bf16.gmra.mxu0 %v1047
    %v1309 = vpop.f32.mrf.mxu0
    %v1310 = vadd.f32 0.0, %v1309
    %v1311 = vpop.f32.mrf.mxu0
    %v1312 = vadd.f32 0.0, %v1311
    %1313 = vmatmul.bf16.gmra.mxu0 %v1050
    %v1314 = vpop.f32.mrf.mxu0
    %v1315 = vadd.f32 0.0, %v1314
    %v1316 = vpop.f32.mrf.mxu0
    %v1317 = vadd.f32 0.0, %v1316
    %1318 = vdwg.mxu0
    %s1319 = scalar_lea.vmem %s11, 64
    %v1320 = vld [vmem:[%s1319] sm:$0xf]
    %v1321 = vld [vmem:[%s1319 + $0x4] sm:$0xf]
    %v1322 = vld [vmem:[%s1319 + $0x8] sm:$0xf]
    %v1323 = vld [vmem:[%s1319 + $0xc] sm:$0xf]
    %v1324 = vld [vmem:[%s1319 + $0x10] sm:$0xf]
    %v1325 = vld [vmem:[%s1319 + $0x14] sm:$0xf]
    %v1326 = vld [vmem:[%s1319 + $0x18] sm:$0xf]
    %v1327 = vld [vmem:[%s1319 + $0x1c] sm:$0xf]
    %v1328 = vpack.c.bf16 %v1312, %v1310
    %v1329 = vpack.c.bf16 %v1317, %v1315
    %v1338 = vunpack.c.l.b16 %v1320
    %v1339 = vunpack.c.l.b16 %v1321
    %v1340 = vunpack.c.l.b16 %v1322
    %v1341 = vunpack.c.l.b16 %v1323
    %v1342 = vunpack.c.l.b16 %v1324
    %v1343 = vunpack.c.l.b16 %v1325
    %v1344 = vunpack.c.l.b16 %v1326
    %v1345 = vunpack.c.l.b16 %v1327
    %v1346 = vpack.c.b16 %v1339, %v1338
    %v1347 = vpack.c.b16 %v1341, %v1340
    %v1348 = vpack.c.b16 %v1343, %v1342
    %v1349 = vpack.c.b16 %v1345, %v1344
    %v1351 = vsel %vm1164, %v1346, 0
    %v1354 = vsel %vm1164, %v1347, 0
    %v1357 = vsel %vm1164, %v1348, 0
    %v1360 = vsel %vm1164, %v1349, 0
    %1362 = vmatpush.bf16.msra.mxu0 0
    %1363 = vmatpush.bf16.msra.mxu0 0
    %1364 = vmatpush.bf16.msra.mxu0 0
    %1365 = vmatpush.bf16.msra.mxu0 0
    %1366 = vmatpush.bf16.msra.mxu0 0
    %1367 = vmatpush.bf16.msra.mxu0 0
    %1368 = vmatpush.bf16.msra.mxu0 %v1329
    %1369 = vmatpush.bf16.msra.mxu0 %v1328
    %1370 = vmatmul.bf16.gmra.mxu0 %v1351
    %v1371 = vpop.f32.mrf.mxu0
    %v1372 = vadd.f32 0.0, %v1371
    %v1373 = vpop.f32.mrf.mxu0
    %v1374 = vadd.f32 0.0, %v1373
    %1375 = vmatmul.bf16.gmra.mxu0 %v1354
    %v1376 = vpop.f32.mrf.mxu0
    %v1377 = vadd.f32 0.0, %v1376
    %v1378 = vpop.f32.mrf.mxu0
    %v1379 = vadd.f32 0.0, %v1378
    %1380 = vmatmul.bf16.gmra.mxu0 %v1357
    %v1381 = vpop.f32.mrf.mxu0
    %v1382 = vadd.f32 0.0, %v1381
    %v1383 = vpop.f32.mrf.mxu0
    %v1384 = vadd.f32 0.0, %v1383
    %1385 = vmatmul.bf16.gmra.mxu0 %v1360
    %v1386 = vpop.f32.mrf.mxu0
    %v1387 = vadd.f32 0.0, %v1386
    %v1388 = vpop.f32.mrf.mxu0
    %v1389 = vadd.f32 0.0, %v1388
    %1390 = vdwg.mxu0
    %v1391 = vadd.f32 %v1248, %v1372
    %v1392 = vadd.f32 %v1250, %v1374
    %v1393 = vadd.f32 %v1253, %v1377
    %v1394 = vadd.f32 %v1255, %v1379
    %v1395 = vadd.f32 %v1258, %v1382
    %v1396 = vadd.f32 %v1260, %v1384
    %v1397 = vadd.f32 %v1263, %v1387
    %v1398 = vadd.f32 %v1265, %v1389
    %s1399 = scalar_lea.vmem [#allocation7], 96
    %v1400 = vld [vmem:[%s1399] sm:$0xf]
    %v1401 = vld [vmem:[%s1399 + $0x4] sm:$0xf]
    %v1402 = vld [vmem:[%s1399 + $0x8] sm:$0xf]
    %v1403 = vld [vmem:[%s1399 + $0xc] sm:$0xf]
    %v1404 = vld [vmem:[%s1399 + $0x10] sm:$0xf]
    %v1405 = vld [vmem:[%s1399 + $0x14] sm:$0xf]
    %v1406 = vld [vmem:[%s1399 + $0x18] sm:$0xf]
    %v1407 = vld [vmem:[%s1399 + $0x1c] sm:$0xf]
    %v1416 = vunpack.c.l.b16 %v1400
    %v1417 = vunpack.c.l.b16 %v1401
    %v1418 = vunpack.c.l.b16 %v1402
    %v1419 = vunpack.c.l.b16 %v1403
    %v1420 = vunpack.c.l.b16 %v1404
    %v1421 = vunpack.c.l.b16 %v1405
    %v1422 = vunpack.c.l.b16 %v1406
    %v1423 = vunpack.c.l.b16 %v1407
    %v1424 = vpack.c.b16 %v1417, %v1416
    %v1425 = vpack.c.b16 %v1419, %v1418
    %v1426 = vpack.c.b16 %v1421, %v1420
    %v1427 = vpack.c.b16 %v1423, %v1422
    %1432 = vmatpush.bf16.msra.mxu0 0
    %1433 = vmatpush.bf16.msra.mxu0 0
    %1434 = vmatpush.bf16.msra.mxu0 0
    %1435 = vmatpush.bf16.msra.mxu0 0
    %1436 = vmatpush.bf16.msra.mxu0 %v1427
    %1437 = vmatpush.bf16.msra.mxu0 %v1426
    %1438 = vmatpush.bf16.msra.mxu0 %v1425
    %1439 = vmatpush.bf16.msra.mxu0 %v1424
    %1440 = vmatmul.bf16.gmra.mxu0 %v1047
    %v1441 = vpop.f32.mrf.mxu0
    %v1442 = vadd.f32 0.0, %v1441
    %v1443 = vpop.f32.mrf.mxu0
    %v1444 = vadd.f32 0.0, %v1443
    %1445 = vmatmul.bf16.gmra.mxu0 %v1050
    %v1446 = vpop.f32.mrf.mxu0
    %v1447 = vadd.f32 0.0, %v1446
    %v1448 = vpop.f32.mrf.mxu0
    %v1449 = vadd.f32 0.0, %v1448
    %1450 = vdwg.mxu0
    %s1451 = scalar_lea.vmem %s11, 96
    %v1452 = vld [vmem:[%s1451] sm:$0xf]
    %v1453 = vld [vmem:[%s1451 + $0x4] sm:$0xf]
    %v1454 = vld [vmem:[%s1451 + $0x8] sm:$0xf]
    %v1455 = vld [vmem:[%s1451 + $0xc] sm:$0xf]
    %v1456 = vld [vmem:[%s1451 + $0x10] sm:$0xf]
    %v1457 = vld [vmem:[%s1451 + $0x14] sm:$0xf]
    %v1458 = vld [vmem:[%s1451 + $0x18] sm:$0xf]
    %v1459 = vld [vmem:[%s1451 + $0x1c] sm:$0xf]
    %v1460 = vpack.c.bf16 %v1444, %v1442
    %v1461 = vpack.c.bf16 %v1449, %v1447
    %v1470 = vunpack.c.l.b16 %v1452
    %v1471 = vunpack.c.l.b16 %v1453
    %v1472 = vunpack.c.l.b16 %v1454
    %v1473 = vunpack.c.l.b16 %v1455
    %v1474 = vunpack.c.l.b16 %v1456
    %v1475 = vunpack.c.l.b16 %v1457
    %v1476 = vunpack.c.l.b16 %v1458
    %v1477 = vunpack.c.l.b16 %v1459
    %v1478 = vpack.c.b16 %v1471, %v1470
    %v1479 = vpack.c.b16 %v1473, %v1472
    %v1480 = vpack.c.b16 %v1475, %v1474
    %v1481 = vpack.c.b16 %v1477, %v1476
    %v1483 = vsel %vm1164, %v1478, 0
    %v1486 = vsel %vm1164, %v1479, 0
    %v1489 = vsel %vm1164, %v1480, 0
    %v1492 = vsel %vm1164, %v1481, 0
    %1494 = vmatpush.bf16.msra.mxu0 0
    %1495 = vmatpush.bf16.msra.mxu0 0
    %1496 = vmatpush.bf16.msra.mxu0 0
    %1497 = vmatpush.bf16.msra.mxu0 0
    %1498 = vmatpush.bf16.msra.mxu0 0
    %1499 = vmatpush.bf16.msra.mxu0 0
    %1500 = vmatpush.bf16.msra.mxu0 %v1461
    %1501 = vmatpush.bf16.msra.mxu0 %v1460
    %1502 = vmatmul.bf16.gmra.mxu0 %v1483
    %v1503 = vpop.f32.mrf.mxu0
    %v1504 = vadd.f32 0.0, %v1503
    %v1505 = vpop.f32.mrf.mxu0
    %v1506 = vadd.f32 0.0, %v1505
    %1507 = vmatmul.bf16.gmra.mxu0 %v1486
    %v1508 = vpop.f32.mrf.mxu0
    %v1509 = vadd.f32 0.0, %v1508
    %v1510 = vpop.f32.mrf.mxu0
    %v1511 = vadd.f32 0.0, %v1510
    %1512 = vmatmul.bf16.gmra.mxu0 %v1489
    %v1513 = vpop.f32.mrf.mxu0
    %v1514 = vadd.f32 0.0, %v1513
    %v1515 = vpop.f32.mrf.mxu0
    %v1516 = vadd.f32 0.0, %v1515
    %1517 = vmatmul.bf16.gmra.mxu0 %v1492
    %v1518 = vpop.f32.mrf.mxu0
    %v1519 = vadd.f32 0.0, %v1518
    %v1520 = vpop.f32.mrf.mxu0
    %v1521 = vadd.f32 0.0, %v1520
    %1522 = vdwg.mxu0
    %v1523 = vadd.f32 %v1391, %v1504
    %v1524 = vadd.f32 %v1392, %v1506
    %v1525 = vadd.f32 %v1393, %v1509
    %v1526 = vadd.f32 %v1394, %v1511
    %v1527 = vadd.f32 %v1395, %v1514
    %v1528 = vadd.f32 %v1396, %v1516
    %v1529 = vadd.f32 %v1397, %v1519
    %v1530 = vadd.f32 %v1398, %v1521
    %v1531 = vld [vmem:[%s12] sm:$0x1]
    %v1533 = vperm.slane %v1531, 0
    %v1535 = vadd.f32 %v1523, %v1533
    %v1536 = vadd.f32 %v1524, %v1533
    %v1537 = vadd.f32 %v1525, %v1533
    %v1538 = vadd.f32 %v1526, %v1533
    %v1539 = vadd.f32 %v1527, %v1533
    %v1540 = vadd.f32 %v1528, %v1533
    %v1541 = vadd.f32 %v1529, %v1533
    %v1542 = vadd.f32 %v1530, %v1533
    %v1543 = vtanh.pop %v1535
    %v1544 = vtanh.pop %v1536
    %v1545 = vtanh.pop %v1537
    %v1546 = vtanh.pop %v1538
    %v1547 = vtanh.pop %v1539
    %v1548 = vtanh.pop %v1540
    %v1549 = vtanh.pop %v1541
    %v1550 = vtanh.pop %v1542
    %1551 = vst.msk [vmem:[#allocation8] sm:$0xff] %vm1164, %v1543
    %1552 = vst.msk [vmem:[#allocation8 + $0x8] sm:$0xff] %vm1164, %v1544
    %1553 = vst.msk [vmem:[#allocation8 + $0x10] sm:$0xff] %vm1164, %v1545
    %1554 = vst.msk [vmem:[#allocation8 + $0x18] sm:$0xff] %vm1164, %v1546
    %s1555 = scalar_lea.vmem [#allocation8], 96
    %1556 = vst.msk [vmem:[%s1555] sm:$0xff] %vm1164, %v1547
    %1557 = vst.msk [vmem:[%s1555 + $0x8] sm:$0xff] %vm1164, %v1548
    %1558 = vst.msk [vmem:[%s1555 + $0x10] sm:$0xff] %vm1164, %v1549
    %1559 = vst.msk [vmem:[%s1555 + $0x18] sm:$0xff] %vm1164, %v1550
    %1564 = vrot.lane.b32.xlu0 %v1543, 96
    %v1565 = vpop.permute.xlu0 %1564
    %1566 = vrot.lane.b32.xlu0 %v1544, 96
    %v1567 = vpop.permute.xlu0 %1566
    %1568 = vrot.lane.b32.xlu0 %v1545, 96
    %v1569 = vpop.permute.xlu0 %1568
    %1570 = vrot.lane.b32.xlu0 %v1546, 96
    %v1571 = vpop.permute.xlu0 %1570
    %s1576 = scalar_lea.vmem [#allocation8], 32
    %1577 = vst.msk [vmem:[%s1576] sm:$0xff] %vm1164, %v1565
    %1578 = vst.msk [vmem:[%s1576 + $0x8] sm:$0xff] %vm1164, %v1567
    %1579 = vst.msk [vmem:[%s1576 + $0x10] sm:$0xff] %vm1164, %v1569
    %1580 = vst.msk [vmem:[%s1576 + $0x18] sm:$0xff] %vm1164, %v1571
    %1585 = vrot.lane.b32.xlu0 %v1547, 96
    %v1586 = vpop.permute.xlu0 %1585
    %1587 = vrot.lane.b32.xlu0 %v1548, 96
    %v1588 = vpop.permute.xlu0 %1587
    %1589 = vrot.lane.b32.xlu0 %v1549, 96
    %v1590 = vpop.permute.xlu0 %1589
    %1591 = vrot.lane.b32.xlu0 %v1550, 96
    %v1592 = vpop.permute.xlu0 %1591
    %s1597 = scalar_lea.vmem [#allocation8], 128
    %1598 = vst.msk [vmem:[%s1597] sm:$0xff] %vm1164, %v1586
    %1599 = vst.msk [vmem:[%s1597 + $0x8] sm:$0xff] %vm1164, %v1588
    %1600 = vst.msk [vmem:[%s1597 + $0x10] sm:$0xff] %vm1164, %v1590
    %1601 = vst.msk [vmem:[%s1597 + $0x18] sm:$0xff] %vm1164, %v1592
    %1602 = vrot.lane.b32.xlu0 %v1543, 64
    %v1603 = vpop.permute.xlu0 %1602
    %1604 = vrot.lane.b32.xlu0 %v1544, 64
    %v1605 = vpop.permute.xlu0 %1604
    %1606 = vrot.lane.b32.xlu0 %v1545, 64
    %v1607 = vpop.permute.xlu0 %1606
    %1608 = vrot.lane.b32.xlu0 %v1546, 64
    %v1609 = vpop.permute.xlu0 %1608
    %s1614 = scalar_lea.vmem [#allocation8], 64
    %1615 = vst.msk [vmem:[%s1614] sm:$0xff] %vm1164, %v1603
    %1616 = vst.msk [vmem:[%s1614 + $0x8] sm:$0xff] %vm1164, %v1605
    %1617 = vst.msk [vmem:[%s1614 + $0x10] sm:$0xff] %vm1164, %v1607
    %1618 = vst.msk [vmem:[%s1614 + $0x18] sm:$0xff] %vm1164, %v1609
    %1619 = vrot.lane.b32.xlu0 %v1547, 64
    %v1620 = vpop.permute.xlu0 %1619
    %1621 = vrot.lane.b32.xlu0 %v1548, 64
    %v1622 = vpop.permute.xlu0 %1621
    %1623 = vrot.lane.b32.xlu0 %v1549, 64
    %v1624 = vpop.permute.xlu0 %1623
    %1625 = vrot.lane.b32.xlu0 %v1550, 64
    %v1626 = vpop.permute.xlu0 %1625
    %s1631 = scalar_lea.vmem [#allocation8], 160
    %1632 = vst.msk [vmem:[%s1631] sm:$0xff] %vm1164, %v1620
    %1633 = vst.msk [vmem:[%s1631 + $0x8] sm:$0xff] %vm1164, %v1622
    %1634 = vst.msk [vmem:[%s1631 + $0x10] sm:$0xff] %vm1164, %v1624
    %1635 = vst.msk [vmem:[%s1631 + $0x18] sm:$0xff] %vm1164, %v1626
    // Predicated region
    $region66: #{generator_forward.1} parent=1 // pred_check
      _
    $region67: #{generator_forward.1} parent=1 // pred_check_branch
      %1637 = sbr.rel (0) target = $region69
    $region68: #{generator_forward.1} parent=1 // pred_region
      %1639 = vsyncadd [#allocation4], 0
      %s1640 = sshll.u32 [#allocation8], 4
      %s1641 = int_to_ptr.vmem [resolvable:$true] %s1640
      %s1642 = sshll.u32 %s13, 4
      %s1643 = int_to_ptr.hbm [resolvable:$true] %s1642
      %1648 = dma.vmem_to_hbm [thread:$0]  %s1641, 3072, %s1643, [#allocation4], 128, 128, 8
    $region69: #{generator_forward.1} parent=1 // pred_fallthru
      _
    // Predicated region
    $region70: #{generator_forward.1} parent=1 // pred_check
      _
    $region71: #{generator_forward.1} parent=1 // pred_check_branch
      %1650 = sbr.rel (0) target = $region73
    $region72: #{generator_forward.1} parent=1 // pred_region
      %1652 = dma.done [#allocation4], 3072
    $region73: #{generator_forward.1} parent=1 // pred_fallthru
      _
    %1653 = vsyncpa [#allocation3], 1
    %1654 = vsyncpa [#allocation6], 1
    %1655 = vsyncpa [#allocation4], 1

</llo_original>
